<compile_context>
chip_gen: v7x
topology: tpu7x:2x2x1
jax: 0.10.0
libtpu: 0.0.40
codegen_flags: <defaults>
</compile_context>

<pallas_src>
import jax
import jax.numpy as jnp
from jax.experimental import pallas as pl
from jax.experimental.pallas import tpu as pltpu

LN_EPS = 1e-5


# --------------------------------------------------------------------------
# Kernel
# --------------------------------------------------------------------------
def output_conv_kernel(x_ref,
                       w1_ref, b1_ref, g1_ref, be1_ref,
                       w2_ref, b2_ref, g2_ref, be2_ref,
                       w3_ref, b3_ref, g3_ref, be3_ref,
                       w4_ref, b4_ref,
                       o_ref):
    # x tile: (C_in, tile_t) -- channels on sublanes, time on lanes.
    x = x_ref[0]

    def conv_ln_relu(h_in, w_ref, b_ref, g_ref, be_ref):
        # Conv1d(k=1): (Cout, Cin) @ (Cin, Tt) on the MXU, f32 accumulation.
        # h_in is cast to the (possibly bf16) weight dtype here, inside the
        # kernel, so the HBM-streamed activation stays f32.
        h = jnp.dot(w_ref[...], h_in.astype(w_ref.dtype),
                    preferred_element_type=jnp.float32) + b_ref[...]
        # LayerNorm over channels (sublane axis), two-pass mean/var, f32.
        inv_c = 1.0 / h.shape[0]
        mu = jnp.sum(h, axis=0, keepdims=True) * inv_c
        c = h - mu
        var = jnp.sum(c * c, axis=0, keepdims=True) * inv_c
        h = c * jax.lax.rsqrt(var + LN_EPS) * g_ref[...] + be_ref[...]
        return jnp.maximum(h, 0.0)                          # ReLU, f32

    h = conv_ln_relu(x, w1_ref, b1_ref, g1_ref, be1_ref)    # D     -> D
    h = conv_ln_relu(h, w2_ref, b2_ref, g2_ref, be2_ref)    # D     -> D/2
    h = conv_ln_relu(h, w3_ref, b3_ref, g3_ref, be3_ref)    # D/2   -> D/2
    # Final Conv1d(D/2 -> numClasses), no norm / activation.
    out = jnp.dot(w4_ref[...], h.astype(w4_ref.dtype),
                  preferred_element_type=jnp.float32) + b4_ref[...]
    o_ref[0] = out.astype(o_ref.dtype)


# --------------------------------------------------------------------------
# VMEM budgeting helpers
# --------------------------------------------------------------------------
def _round_up(v, m):
    return ((v + m - 1) // m) * m


def _padded_2d_bytes(shape, itemsize):
    # VMEM layout pads second-to-last dim to 8 sublanes, last dim to 128 lanes.
    r = _round_up(max(int(shape[0]), 1), 8)
    c = _round_up(max(int(shape[1]), 1), 128)
    return r * c * itemsize


def _vmem_budget_bytes(kparams, D, n_cls, tt, param_buffers):
    p_bytes = sum(_padded_2d_bytes(p.shape, p.dtype.itemsize) * param_buffers
                  for p in kparams)
    x_bytes = _round_up(D, 8) * tt * 4 * 2          # f32 input tile, 2 buffers
    o_bytes = _round_up(n_cls, 8) * tt * 4 * 2      # f32 output tile, 2 buffers
    act_bytes = 3 * _round_up(D, 8) * tt * 4        # intermediate activations
    return p_bytes + x_bytes + o_bytes + act_bytes


# --------------------------------------------------------------------------
# Wrapper
# --------------------------------------------------------------------------
def output_conv(x, params, *, tile_t=None, compute_dtype=jnp.bfloat16,
                single_buffer_params=True):
    """x: (B, dModel, T) NCW like PyTorch Conv1d.  Returns (B, numClasses, T) f32.

    compute_dtype: dtype of the MXU matmul operands (default bf16; MXU
    accumulation and LayerNorm math stay f32).  Pass jnp.float32/None for a
    bit-faithful f32 path.
    """
    (w1, b1, g1, be1, w2, b2, g2, be2, w3, b3, g3, be3, w4, b4) = params
    B, D, T = x.shape
    n_cls = w4.shape[0]

    # Cast only the (VMEM-resident) weights; streamed x stays f32 in HBM and
    # is cast per-tile inside the kernel.
    if compute_dtype is not None:
        w1, w2, w3, w4 = (w.astype(compute_dtype) for w in (w1, w2, w3, w4))
    kparams = (w1, b1, g1, be1, w2, b2, g2, be2, w3, b3, g3, be3, w4, b4)

    # Per-TensorCore VMEM capacity (v5e/v6e: 128 MiB, v7x: 64 MiB).
    try:
        vmem_cap = int(pltpu.get_tpu_info().vmem_capacity_bytes)
    except Exception:
        vmem_cap = 64 * 1024 * 1024   # conservative fallback (v7x per-TC)

    # ---- time tiling: keep the lane (time) axis dense (multiples of 128) ----
    pad_to = None
    if T < 128:
        pad_to = 128                   # tiny sequences: one lane-dense tile
        tt_max = 128
    elif T % 128 == 0:
        tt_max = T
    else:
        # Ragged T >= 128: no wrapper pad; Pallas masks the partial edge block.
        tt_max = (T // 128) * 128

    param_buffers = 1 if single_buffer_params else 2
    if tile_t is None:
        tile_t = 128
        for cand in (1024, 512, 256, 128):
            if cand > tt_max:
                continue
            if (_vmem_budget_bytes(kparams, D, n_cls, cand, param_buffers)
                    <= 0.5 * vmem_cap):
                tile_t = cand
                break
    tt = max(128, min(int(tile_t), tt_max))
    tt = (tt // 128) * 128

    if pad_to is not None and pad_to != T:
        x = jnp.pad(x, ((0, 0), (0, 0), (0, pad_to - T)))
    Tp = x.shape[2]
    grid = (B, pl.cdiv(Tp, tt))

    budget = _vmem_budget_bytes(kparams, D, n_cls, tt, param_buffers)
    vmem_limit = int(min(int(0.9 * vmem_cap),
                         max(32 * 1024 * 1024, 2 * budget)))

    data_map = lambda b, t: (b, 0, t)     # activation / output tiles
    const_map = lambda b, t: (0, 0)       # resident weights / norm params

    def run(use_single_buffer):
        if use_single_buffer:
            param_specs = [pl.BlockSpec(p.shape, const_map,
                                        pipeline_mode=pl.Buffered(1))
                           for p in kparams]
        else:
            param_specs = [pl.BlockSpec(p.shape, const_map) for p in kparams]
        return pl.pallas_call(
            output_conv_kernel,
            out_shape=jax.ShapeDtypeStruct((B, n_cls, Tp), jnp.float32),
            grid_spec=pltpu.PrefetchScalarGridSpec(
                num_scalar_prefetch=0,
                grid=grid,
                in_specs=[pl.BlockSpec((1, D, tt), data_map)] + param_specs,
                out_specs=pl.BlockSpec((1, n_cls, tt), data_map),
            ),
            compiler_params=pltpu.CompilerParams(
                dimension_semantics=("parallel", "parallel"),
                vmem_limit_bytes=vmem_limit),
        )(x, *kparams)

    if single_buffer_params:
        try:
            out = run(True)
        except Exception:
            # pl.Buffered(1) unsupported on this jax version -> default buffering.
            out = run(False)
    else:
        out = run(False)

    if pad_to is not None and Tp != T:
        out = out[:, :, :T]
    return out


# --------------------------------------------------------------------------
# Parameter init (PyTorch Conv1d / LayerNorm defaults) and pure-JAX reference
# --------------------------------------------------------------------------
def init_params(key, d_model, num_classes):
    """Conv1d weight (out, in, 1) stored as (out, in); biases / gamma / beta
    stored as (C, 1) so they broadcast over the time (lane) axis."""
    d2 = d_model // 2
    ks = jax.random.split(key, 4)

    def conv_wb(k, cin, cout):
        kw, kb = jax.random.split(k)
        bound = 1.0 / jnp.sqrt(cin)
        w = jax.random.uniform(kw, (cout, cin), jnp.float32, -bound, bound)
        b = jax.random.uniform(kb, (cout, 1), jnp.float32, -bound, bound)
        return w, b

    w1, b1 = conv_wb(ks[0], d_model, d_model)
    w2, b2 = conv_wb(ks[1], d_model, d2)
    w3, b3 = conv_wb(ks[2], d2, d2)
    w4, b4 = conv_wb(ks[3], d2, num_classes)
    g1, be1 = jnp.ones((d_model, 1), jnp.float32), jnp.zeros((d_model, 1), jnp.float32)
    g2, be2 = jnp.ones((d2, 1), jnp.float32), jnp.zeros((d2, 1), jnp.float32)
    g3, be3 = jnp.ones((d2, 1), jnp.float32), jnp.zeros((d2, 1), jnp.float32)
    return (w1, b1, g1, be1, w2, b2, g2, be2, w3, b3, g3, be3, w4, b4)


def output_conv_ref(x, params):
    """Pure-JAX reference mirroring the PyTorch module (NCW in / NCW out)."""
    (w1, b1, g1, be1, w2, b2, g2, be2, w3, b3, g3, be3, w4, b4) = params

    def block(h, w, b, g, be):
        h = jnp.einsum('oc,bct->bot', w, h) + b[None, :, :]
        mu = jnp.mean(h, axis=1, keepdims=True)
        var = jnp.mean((h - mu) ** 2, axis=1, keepdims=True)
        h = (h - mu) * jax.lax.rsqrt(var + LN_EPS) * g[None, :, :] + be[None, :, :]
        return jnp.maximum(h, 0.0)

    h = block(x, w1, b1, g1, be1)
    h = block(h, w2, b2, g2, be2)
    h = block(h, w3, b3, g3, be3)
    return jnp.einsum('oc,bct->bot', w4, h) + b4[None, :, :]


# --------------------------------------------------------------------------
# Self-test
# --------------------------------------------------------------------------
if __name__ == "__main__":
    B, D_MODEL, T, NUM_CLASSES = 2, 32, 16, 8
    key = jax.random.PRNGKey(0)
    kx, kp = jax.random.split(key)
    x = jax.random.normal(kx, (B, D_MODEL, T), jnp.float32)
    params = init_params(kp, D_MODEL, NUM_CLASSES)

    ref = output_conv_ref(x, params)

    # f32-operand path (tight comparison against the pure-JAX reference).
    out_f32 = jax.block_until_ready(
        output_conv(x, params, compute_dtype=jnp.float32))
    assert out_f32.shape == (B, NUM_CLASSES, T)
    assert jnp.allclose(out_f32, ref, atol=1e-4, rtol=1e-4)

    # Default path: bf16 MXU operands, f32 accumulate / LayerNorm.
    out = jax.block_until_ready(output_conv(x, params))
    assert out.shape == (B, NUM_CLASSES, T)
    assert jnp.all(jnp.isfinite(out))
    assert jnp.allclose(out, ref, atol=0.2, rtol=0.2)

    print("KERNEL_OK")
</pallas_src>

<mosaic_0001>
module attributes {stable_mosaic.version = 11 : i64} {
  func.func @output_conv_kernel(%arg0: i32, %arg1: i32, %arg2: memref<1x32x128xf32, #tpu.memory_space<vmem>>, %arg3: memref<32x32xf32, #tpu.memory_space<vmem>>, %arg4: memref<32x1xf32, #tpu.memory_space<vmem>>, %arg5: memref<32x1xf32, #tpu.memory_space<vmem>>, %arg6: memref<32x1xf32, #tpu.memory_space<vmem>>, %arg7: memref<16x32xf32, #tpu.memory_space<vmem>>, %arg8: memref<16x1xf32, #tpu.memory_space<vmem>>, %arg9: memref<16x1xf32, #tpu.memory_space<vmem>>, %arg10: memref<16x1xf32, #tpu.memory_space<vmem>>, %arg11: memref<16x16xf32, #tpu.memory_space<vmem>>, %arg12: memref<16x1xf32, #tpu.memory_space<vmem>>, %arg13: memref<16x1xf32, #tpu.memory_space<vmem>>, %arg14: memref<16x1xf32, #tpu.memory_space<vmem>>, %arg15: memref<8x16xf32, #tpu.memory_space<vmem>>, %arg16: memref<8x1xf32, #tpu.memory_space<vmem>>, %arg17: memref<1x8x128xf32, #tpu.memory_space<vmem>>) attributes {dimension_semantics = [#tpu.dimension_semantics<parallel>, #tpu.dimension_semantics<parallel>], iteration_bounds = array<i64: 2, 1>, scalar_prefetch = 0 : i64, scratch_operands = 0 : i64, tpu.core_type = #tpu.core_type<tc>, window_params = [{transform_indices = @transform_0, window_bounds = array<i64: 1, 32, 128>}, {pipeline_mode = #tpu.pipeline_mode<synchronous>, transform_indices = @transform_1, window_bounds = array<i64: 32, 32>}, {pipeline_mode = #tpu.pipeline_mode<synchronous>, transform_indices = @transform_2, window_bounds = array<i64: 32, 1>}, {pipeline_mode = #tpu.pipeline_mode<synchronous>, transform_indices = @transform_3, window_bounds = array<i64: 32, 1>}, {pipeline_mode = #tpu.pipeline_mode<synchronous>, transform_indices = @transform_4, window_bounds = array<i64: 32, 1>}, {pipeline_mode = #tpu.pipeline_mode<synchronous>, transform_indices = @transform_5, window_bounds = array<i64: 16, 32>}, {pipeline_mode = #tpu.pipeline_mode<synchronous>, transform_indices = @transform_6, window_bounds = array<i64: 16, 1>}, {pipeline_mode = #tpu.pipeline_mode<synchronous>, transform_indices = @transform_7, window_bounds = array<i64: 16, 1>}, {pipeline_mode = #tpu.pipeline_mode<synchronous>, transform_indices = @transform_8, window_bounds = array<i64: 16, 1>}, {pipeline_mode = #tpu.pipeline_mode<synchronous>, transform_indices = @transform_9, window_bounds = array<i64: 16, 16>}, {pipeline_mode = #tpu.pipeline_mode<synchronous>, transform_indices = @transform_10, window_bounds = array<i64: 16, 1>}, {pipeline_mode = #tpu.pipeline_mode<synchronous>, transform_indices = @transform_11, window_bounds = array<i64: 16, 1>}, {pipeline_mode = #tpu.pipeline_mode<synchronous>, transform_indices = @transform_12, window_bounds = array<i64: 16, 1>}, {pipeline_mode = #tpu.pipeline_mode<synchronous>, transform_indices = @transform_13, window_bounds = array<i64: 8, 16>}, {pipeline_mode = #tpu.pipeline_mode<synchronous>, transform_indices = @transform_14, window_bounds = array<i64: 8, 1>}, {transform_indices = @transform_15, window_bounds = array<i64: 1, 8, 128>}]} {
    %c0 = arith.constant 0 : index
    %c0_0 = arith.constant 0 : index
    %c0_1 = arith.constant 0 : index
    %0 = vector.load %arg2[%c0, %c0_0, %c0_1] : memref<1x32x128xf32, #tpu.memory_space<vmem>>, vector<1x32x128xf32>
    %1 = vector.shape_cast %0 : vector<1x32x128xf32> to vector<32x128xf32>
    %c0_2 = arith.constant 0 : index
    %c0_3 = arith.constant 0 : index
    %2 = vector.load %arg3[%c0_2, %c0_3] : memref<32x32xf32, #tpu.memory_space<vmem>>, vector<32x32xf32>
    %cst = arith.constant dense<0.000000e+00> : vector<32x128xf32>
    %3 = tpu.matmul %2, %1, %cst {dimension_numbers = #tpu.dot_dimension_numbers<[1], [0], [0], [1], [0, 0, 1, 1], [], []>} : vector<32x32xf32>, vector<32x128xf32>, vector<32x128xf32> -> vector<32x128xf32>
    %c0_4 = arith.constant 0 : index
    %c0_5 = arith.constant 0 : index
    %4 = vector.load %arg4[%c0_4, %c0_5] : memref<32x1xf32, #tpu.memory_space<vmem>>, vector<32x1xf32>
    %5 = vector.broadcast %4 : vector<32x1xf32> to vector<32x128xf32>
    %6 = arith.addf %3, %5 : vector<32x128xf32>
    %cst_6 = arith.constant dense<0.000000e+00> : vector<128xf32>
    %7 = vector.multi_reduction <add>, %6, %cst_6 [0] : vector<32x128xf32> to vector<128xf32>
    %8 = vector.shape_cast %7 : vector<128xf32> to vector<1x128xf32>
    %cst_7 = arith.constant 3.125000e-02 : f32
    %9 = vector.broadcast %cst_7 : f32 to vector<1x128xf32>
    %10 = arith.mulf %8, %9 : vector<1x128xf32>
    %11 = vector.broadcast %10 : vector<1x128xf32> to vector<32x128xf32>
    %12 = arith.subf %6, %11 : vector<32x128xf32>
    %13 = arith.mulf %12, %12 : vector<32x128xf32>
    %cst_8 = arith.constant dense<0.000000e+00> : vector<128xf32>
    %14 = vector.multi_reduction <add>, %13, %cst_8 [0] : vector<32x128xf32> to vector<128xf32>
    %15 = vector.shape_cast %14 : vector<128xf32> to vector<1x128xf32>
    %cst_9 = arith.constant 3.125000e-02 : f32
    %16 = vector.broadcast %cst_9 : f32 to vector<1x128xf32>
    %17 = arith.mulf %15, %16 : vector<1x128xf32>
    %cst_10 = arith.constant 9.99999974E-6 : f32
    %18 = vector.broadcast %cst_10 : f32 to vector<1x128xf32>
    %19 = arith.addf %17, %18 : vector<1x128xf32>
    %20 = math.rsqrt %19 : vector<1x128xf32>
    %21 = vector.broadcast %20 : vector<1x128xf32> to vector<32x128xf32>
    %22 = arith.mulf %12, %21 : vector<32x128xf32>
    %c0_11 = arith.constant 0 : index
    %c0_12 = arith.constant 0 : index
    %23 = vector.load %arg5[%c0_11, %c0_12] : memref<32x1xf32, #tpu.memory_space<vmem>>, vector<32x1xf32>
    %24 = vector.broadcast %23 : vector<32x1xf32> to vector<32x128xf32>
    %25 = arith.mulf %22, %24 : vector<32x128xf32>
    %c0_13 = arith.constant 0 : index
    %c0_14 = arith.constant 0 : index
    %26 = vector.load %arg6[%c0_13, %c0_14] : memref<32x1xf32, #tpu.memory_space<vmem>>, vector<32x1xf32>
    %27 = vector.broadcast %26 : vector<32x1xf32> to vector<32x128xf32>
    %28 = arith.addf %25, %27 : vector<32x128xf32>
    %cst_15 = arith.constant 0.000000e+00 : f32
    %29 = vector.broadcast %cst_15 : f32 to vector<32x128xf32>
    %30 = arith.maximumf %28, %29 : vector<32x128xf32>
    %c0_16 = arith.constant 0 : index
    %c0_17 = arith.constant 0 : index
    %31 = vector.load %arg7[%c0_16, %c0_17] : memref<16x32xf32, #tpu.memory_space<vmem>>, vector<16x32xf32>
    %cst_18 = arith.constant dense<0.000000e+00> : vector<16x128xf32>
    %32 = tpu.matmul %31, %30, %cst_18 {dimension_numbers = #tpu.dot_dimension_numbers<[1], [0], [0], [1], [0, 0, 1, 1], [], []>} : vector<16x32xf32>, vector<32x128xf32>, vector<16x128xf32> -> vector<16x128xf32>
    %c0_19 = arith.constant 0 : index
    %c0_20 = arith.constant 0 : index
    %33 = vector.load %arg8[%c0_19, %c0_20] : memref<16x1xf32, #tpu.memory_space<vmem>>, vector<16x1xf32>
    %34 = vector.broadcast %33 : vector<16x1xf32> to vector<16x128xf32>
    %35 = arith.addf %32, %34 : vector<16x128xf32>
    %cst_21 = arith.constant dense<0.000000e+00> : vector<128xf32>
    %36 = vector.multi_reduction <add>, %35, %cst_21 [0] : vector<16x128xf32> to vector<128xf32>
    %37 = vector.shape_cast %36 : vector<128xf32> to vector<1x128xf32>
    %cst_22 = arith.constant 6.250000e-02 : f32
    %38 = vector.broadcast %cst_22 : f32 to vector<1x128xf32>
    %39 = arith.mulf %37, %38 : vector<1x128xf32>
    %40 = vector.broadcast %39 : vector<1x128xf32> to vector<16x128xf32>
    %41 = arith.subf %35, %40 : vector<16x128xf32>
    %42 = arith.mulf %41, %41 : vector<16x128xf32>
    %cst_23 = arith.constant dense<0.000000e+00> : vector<128xf32>
    %43 = vector.multi_reduction <add>, %42, %cst_23 [0] : vector<16x128xf32> to vector<128xf32>
    %44 = vector.shape_cast %43 : vector<128xf32> to vector<1x128xf32>
    %cst_24 = arith.constant 6.250000e-02 : f32
    %45 = vector.broadcast %cst_24 : f32 to vector<1x128xf32>
    %46 = arith.mulf %44, %45 : vector<1x128xf32>
    %cst_25 = arith.constant 9.99999974E-6 : f32
    %47 = vector.broadcast %cst_25 : f32 to vector<1x128xf32>
    %48 = arith.addf %46, %47 : vector<1x128xf32>
    %49 = math.rsqrt %48 : vector<1x128xf32>
    %50 = vector.broadcast %49 : vector<1x128xf32> to vector<16x128xf32>
    %51 = arith.mulf %41, %50 : vector<16x128xf32>
    %c0_26 = arith.constant 0 : index
    %c0_27 = arith.constant 0 : index
    %52 = vector.load %arg9[%c0_26, %c0_27] : memref<16x1xf32, #tpu.memory_space<vmem>>, vector<16x1xf32>
    %53 = vector.broadcast %52 : vector<16x1xf32> to vector<16x128xf32>
    %54 = arith.mulf %51, %53 : vector<16x128xf32>
    %c0_28 = arith.constant 0 : index
    %c0_29 = arith.constant 0 : index
    %55 = vector.load %arg10[%c0_28, %c0_29] : memref<16x1xf32, #tpu.memory_space<vmem>>, vector<16x1xf32>
    %56 = vector.broadcast %55 : vector<16x1xf32> to vector<16x128xf32>
    %57 = arith.addf %54, %56 : vector<16x128xf32>
    %cst_30 = arith.constant 0.000000e+00 : f32
    %58 = vector.broadcast %cst_30 : f32 to vector<16x128xf32>
    %59 = arith.maximumf %57, %58 : vector<16x128xf32>
    %c0_31 = arith.constant 0 : index
    %c0_32 = arith.constant 0 : index
    %60 = vector.load %arg11[%c0_31, %c0_32] : memref<16x16xf32, #tpu.memory_space<vmem>>, vector<16x16xf32>
    %cst_33 = arith.constant dense<0.000000e+00> : vector<16x128xf32>
    %61 = tpu.matmul %60, %59, %cst_33 {dimension_numbers = #tpu.dot_dimension_numbers<[1], [0], [0], [1], [0, 0, 1, 1], [], []>} : vector<16x16xf32>, vector<16x128xf32>, vector<16x128xf32> -> vector<16x128xf32>
    %c0_34 = arith.constant 0 : index
    %c0_35 = arith.constant 0 : index
    %62 = vector.load %arg12[%c0_34, %c0_35] : memref<16x1xf32, #tpu.memory_space<vmem>>, vector<16x1xf32>
    %63 = vector.broadcast %62 : vector<16x1xf32> to vector<16x128xf32>
    %64 = arith.addf %61, %63 : vector<16x128xf32>
    %cst_36 = arith.constant dense<0.000000e+00> : vector<128xf32>
    %65 = vector.multi_reduction <add>, %64, %cst_36 [0] : vector<16x128xf32> to vector<128xf32>
    %66 = vector.shape_cast %65 : vector<128xf32> to vector<1x128xf32>
    %cst_37 = arith.constant 6.250000e-02 : f32
    %67 = vector.broadcast %cst_37 : f32 to vector<1x128xf32>
    %68 = arith.mulf %66, %67 : vector<1x128xf32>
    %69 = vector.broadcast %68 : vector<1x128xf32> to vector<16x128xf32>
    %70 = arith.subf %64, %69 : vector<16x128xf32>
    %71 = arith.mulf %70, %70 : vector<16x128xf32>
    %cst_38 = arith.constant dense<0.000000e+00> : vector<128xf32>
    %72 = vector.multi_reduction <add>, %71, %cst_38 [0] : vector<16x128xf32> to vector<128xf32>
    %73 = vector.shape_cast %72 : vector<128xf32> to vector<1x128xf32>
    %cst_39 = arith.constant 6.250000e-02 : f32
    %74 = vector.broadcast %cst_39 : f32 to vector<1x128xf32>
    %75 = arith.mulf %73, %74 : vector<1x128xf32>
    %cst_40 = arith.constant 9.99999974E-6 : f32
    %76 = vector.broadcast %cst_40 : f32 to vector<1x128xf32>
    %77 = arith.addf %75, %76 : vector<1x128xf32>
    %78 = math.rsqrt %77 : vector<1x128xf32>
    %79 = vector.broadcast %78 : vector<1x128xf32> to vector<16x128xf32>
    %80 = arith.mulf %70, %79 : vector<16x128xf32>
    %c0_41 = arith.constant 0 : index
    %c0_42 = arith.constant 0 : index
    %81 = vector.load %arg13[%c0_41, %c0_42] : memref<16x1xf32, #tpu.memory_space<vmem>>, vector<16x1xf32>
    %82 = vector.broadcast %81 : vector<16x1xf32> to vector<16x128xf32>
    %83 = arith.mulf %80, %82 : vector<16x128xf32>
    %c0_43 = arith.constant 0 : index
    %c0_44 = arith.constant 0 : index
    %84 = vector.load %arg14[%c0_43, %c0_44] : memref<16x1xf32, #tpu.memory_space<vmem>>, vector<16x1xf32>
    %85 = vector.broadcast %84 : vector<16x1xf32> to vector<16x128xf32>
    %86 = arith.addf %83, %85 : vector<16x128xf32>
    %cst_45 = arith.constant 0.000000e+00 : f32
    %87 = vector.broadcast %cst_45 : f32 to vector<16x128xf32>
    %88 = arith.maximumf %86, %87 : vector<16x128xf32>
    %c0_46 = arith.constant 0 : index
    %c0_47 = arith.constant 0 : index
    %89 = vector.load %arg15[%c0_46, %c0_47] : memref<8x16xf32, #tpu.memory_space<vmem>>, vector<8x16xf32>
    %cst_48 = arith.constant dense<0.000000e+00> : vector<8x128xf32>
    %90 = tpu.matmul %89, %88, %cst_48 {dimension_numbers = #tpu.dot_dimension_numbers<[1], [0], [0], [1], [0, 0, 1, 1], [], []>} : vector<8x16xf32>, vector<16x128xf32>, vector<8x128xf32> -> vector<8x128xf32>
    %c0_49 = arith.constant 0 : index
    %c0_50 = arith.constant 0 : index
    %91 = vector.load %arg16[%c0_49, %c0_50] : memref<8x1xf32, #tpu.memory_space<vmem>>, vector<8x1xf32>
    %92 = vector.broadcast %91 : vector<8x1xf32> to vector<8x128xf32>
    %93 = arith.addf %90, %92 : vector<8x128xf32>
    %c0_51 = arith.constant 0 : index
    %c0_52 = arith.constant 0 : index
    %c0_53 = arith.constant 0 : index
    %94 = vector.load %arg17[%c0_51, %c0_52, %c0_53] : memref<1x8x128xf32, #tpu.memory_space<vmem>>, vector<1x8x128xf32>
    %95 = vector.shape_cast %94 : vector<1x8x128xf32> to vector<8x128xf32>
    %96 = vector.shape_cast %93 : vector<8x128xf32> to vector<1x8x128xf32>
    tpu.vector_store %arg17[%c0_51, %c0_52, %c0_53], %96 {strides = array<i32>} : memref<1x8x128xf32, #tpu.memory_space<vmem>>, vector<1x8x128xf32>,
    return
  }
  func.func @transform_0(%arg0: i32, %arg1: i32) -> (i32, i32, i32) {
    %c0_i32 = arith.constant 0 : i32
    %c0_i32_0 = arith.constant 0 : i32
    return %arg0, %c0_i32, %arg1 : i32, i32, i32
  }
  func.func @transform_1(%arg0: i32, %arg1: i32) -> (i32, i32) {
    %c0_i32 = arith.constant 0 : i32
    %c0_i32_0 = arith.constant 0 : i32
    %c0_i32_1 = arith.constant 0 : i32
    return %c0_i32, %c0_i32_0 : i32, i32
  }
  func.func @transform_2(%arg0: i32, %arg1: i32) -> (i32, i32) {
    %c0_i32 = arith.constant 0 : i32
    %c0_i32_0 = arith.constant 0 : i32
    %c0_i32_1 = arith.constant 0 : i32
    return %c0_i32, %c0_i32_0 : i32, i32
  }
  func.func @transform_3(%arg0: i32, %arg1: i32) -> (i32, i32) {
    %c0_i32 = arith.constant 0 : i32
    %c0_i32_0 = arith.constant 0 : i32
    %c0_i32_1 = arith.constant 0 : i32
    return %c0_i32, %c0_i32_0 : i32, i32
  }
  func.func @transform_4(%arg0: i32, %arg1: i32) -> (i32, i32) {
    %c0_i32 = arith.constant 0 : i32
    %c0_i32_0 = arith.constant 0 : i32
    %c0_i32_1 = arith.constant 0 : i32
    return %c0_i32, %c0_i32_0 : i32, i32
  }
  func.func @transform_5(%arg0: i32, %arg1: i32) -> (i32, i32) {
    %c0_i32 = arith.constant 0 : i32
    %c0_i32_0 = arith.constant 0 : i32
    %c0_i32_1 = arith.constant 0 : i32
    return %c0_i32, %c0_i32_0 : i32, i32
  }
  func.func @transform_6(%arg0: i32, %arg1: i32) -> (i32, i32) {
    %c0_i32 = arith.constant 0 : i32
    %c0_i32_0 = arith.constant 0 : i32
    %c0_i32_1 = arith.constant 0 : i32
    return %c0_i32, %c0_i32_0 : i32, i32
  }
  func.func @transform_7(%arg0: i32, %arg1: i32) -> (i32, i32) {
    %c0_i32 = arith.constant 0 : i32
    %c0_i32_0 = arith.constant 0 : i32
    %c0_i32_1 = arith.constant 0 : i32
    return %c0_i32, %c0_i32_0 : i32, i32
  }
  func.func @transform_8(%arg0: i32, %arg1: i32) -> (i32, i32) {
    %c0_i32 = arith.constant 0 : i32
    %c0_i32_0 = arith.constant 0 : i32
    %c0_i32_1 = arith.constant 0 : i32
    return %c0_i32, %c0_i32_0 : i32, i32
  }
  func.func @transform_9(%arg0: i32, %arg1: i32) -> (i32, i32) {
    %c0_i32 = arith.constant 0 : i32
    %c0_i32_0 = arith.constant 0 : i32
    %c0_i32_1 = arith.constant 0 : i32
    return %c0_i32, %c0_i32_0 : i32, i32
  }
  func.func @transform_10(%arg0: i32, %arg1: i32) -> (i32, i32) {
    %c0_i32 = arith.constant 0 : i32
    %c0_i32_0 = arith.constant 0 : i32
    %c0_i32_1 = arith.constant 0 : i32
    return %c0_i32, %c0_i32_0 : i32, i32
  }
  func.func @transform_11(%arg0: i32, %arg1: i32) -> (i32, i32) {
    %c0_i32 = arith.constant 0 : i32
    %c0_i32_0 = arith.constant 0 : i32
    %c0_i32_1 = arith.constant 0 : i32
    return %c0_i32, %c0_i32_0 : i32, i32
  }
  func.func @transform_12(%arg0: i32, %arg1: i32) -> (i32, i32) {
    %c0_i32 = arith.constant 0 : i32
    %c0_i32_0 = arith.constant 0 : i32
    %c0_i32_1 = arith.constant 0 : i32
    return %c0_i32, %c0_i32_0 : i32, i32
  }
  func.func @transform_13(%arg0: i32, %arg1: i32) -> (i32, i32) {
    %c0_i32 = arith.constant 0 : i32
    %c0_i32_0 = arith.constant 0 : i32
    %c0_i32_1 = arith.constant 0 : i32
    return %c0_i32, %c0_i32_0 : i32, i32
  }
  func.func @transform_14(%arg0: i32, %arg1: i32) -> (i32, i32) {
    %c0_i32 = arith.constant 0 : i32
    %c0_i32_0 = arith.constant 0 : i32
    %c0_i32_1 = arith.constant 0 : i32
    return %c0_i32, %c0_i32_0 : i32, i32
  }
  func.func @transform_15(%arg0: i32, %arg1: i32) -> (i32, i32, i32) {
    %c0_i32 = arith.constant 0 : i32
    %c0_i32_0 = arith.constant 0 : i32
    return %arg0, %c0_i32, %arg1 : i32, i32, i32
  }
}

module attributes {stable_mosaic.version = 11 : i64} {
  func.func @output_conv_kernel(%arg0: i32, %arg1: i32, %arg2: memref<1x32x128xf32, #tpu.memory_space<vmem>>, %arg3: memref<32x32xf32, #tpu.memory_space<vmem>>, %arg4: memref<32x1xf32, #tpu.memory_space<vmem>>, %arg5: memref<32x1xf32, #tpu.memory_space<vmem>>, %arg6: memref<32x1xf32, #tpu.memory_space<vmem>>, %arg7: memref<16x32xf32, #tpu.memory_space<vmem>>, %arg8: memref<16x1xf32, #tpu.memory_space<vmem>>, %arg9: memref<16x1xf32, #tpu.memory_space<vmem>>, %arg10: memref<16x1xf32, #tpu.memory_space<vmem>>, %arg11: memref<16x16xf32, #tpu.memory_space<vmem>>, %arg12: memref<16x1xf32, #tpu.memory_space<vmem>>, %arg13: memref<16x1xf32, #tpu.memory_space<vmem>>, %arg14: memref<16x1xf32, #tpu.memory_space<vmem>>, %arg15: memref<8x16xf32, #tpu.memory_space<vmem>>, %arg16: memref<8x1xf32, #tpu.memory_space<vmem>>, %arg17: memref<1x8x128xf32, #tpu.memory_space<vmem>>) attributes {dimension_semantics = [#tpu.dimension_semantics<parallel>, #tpu.dimension_semantics<parallel>], iteration_bounds = array<i64: 2, 1>, scalar_prefetch = 0 : i64, scratch_operands = 0 : i64, tpu.core_type = #tpu.core_type<tc>, window_params = [{transform_indices = @transform_0, window_bounds = array<i64: 1, 32, 128>}, {pipeline_mode = #tpu.pipeline_mode<synchronous>, transform_indices = @transform_1, window_bounds = array<i64: 32, 32>}, {pipeline_mode = #tpu.pipeline_mode<synchronous>, transform_indices = @transform_2, window_bounds = array<i64: 32, 1>}, {pipeline_mode = #tpu.pipeline_mode<synchronous>, transform_indices = @transform_3, window_bounds = array<i64: 32, 1>}, {pipeline_mode = #tpu.pipeline_mode<synchronous>, transform_indices = @transform_4, window_bounds = array<i64: 32, 1>}, {pipeline_mode = #tpu.pipeline_mode<synchronous>, transform_indices = @transform_5, window_bounds = array<i64: 16, 32>}, {pipeline_mode = #tpu.pipeline_mode<synchronous>, transform_indices = @transform_6, window_bounds = array<i64: 16, 1>}, {pipeline_mode = #tpu.pipeline_mode<synchronous>, transform_indices = @transform_7, window_bounds = array<i64: 16, 1>}, {pipeline_mode = #tpu.pipeline_mode<synchronous>, transform_indices = @transform_8, window_bounds = array<i64: 16, 1>}, {pipeline_mode = #tpu.pipeline_mode<synchronous>, transform_indices = @transform_9, window_bounds = array<i64: 16, 16>}, {pipeline_mode = #tpu.pipeline_mode<synchronous>, transform_indices = @transform_10, window_bounds = array<i64: 16, 1>}, {pipeline_mode = #tpu.pipeline_mode<synchronous>, transform_indices = @transform_11, window_bounds = array<i64: 16, 1>}, {pipeline_mode = #tpu.pipeline_mode<synchronous>, transform_indices = @transform_12, window_bounds = array<i64: 16, 1>}, {pipeline_mode = #tpu.pipeline_mode<synchronous>, transform_indices = @transform_13, window_bounds = array<i64: 8, 16>}, {pipeline_mode = #tpu.pipeline_mode<synchronous>, transform_indices = @transform_14, window_bounds = array<i64: 8, 1>}, {transform_indices = @transform_15, window_bounds = array<i64: 1, 8, 128>}]} {
    %c0 = arith.constant 0 : index
    %c0_0 = arith.constant 0 : index
    %c0_1 = arith.constant 0 : index
    %0 = vector.load %arg2[%c0, %c0_0, %c0_1] : memref<1x32x128xf32, #tpu.memory_space<vmem>>, vector<1x32x128xf32>
    %1 = vector.shape_cast %0 : vector<1x32x128xf32> to vector<32x128xf32>
    %c0_2 = arith.constant 0 : index
    %c0_3 = arith.constant 0 : index
    %2 = vector.load %arg3[%c0_2, %c0_3] : memref<32x32xf32, #tpu.memory_space<vmem>>, vector<32x32xf32>
    %cst = arith.constant dense<0.000000e+00> : vector<32x128xf32>
    %3 = tpu.matmul %2, %1, %cst {dimension_numbers = #tpu.dot_dimension_numbers<[1], [0], [0], [1], [0, 0, 1, 1], [], []>} : vector<32x32xf32>, vector<32x128xf32>, vector<32x128xf32> -> vector<32x128xf32>
    %c0_4 = arith.constant 0 : index
    %c0_5 = arith.constant 0 : index
    %4 = vector.load %arg4[%c0_4, %c0_5] : memref<32x1xf32, #tpu.memory_space<vmem>>, vector<32x1xf32>
    %5 = vector.broadcast %4 : vector<32x1xf32> to vector<32x128xf32>
    %6 = arith.addf %3, %5 : vector<32x128xf32>
    %cst_6 = arith.constant dense<0.000000e+00> : vector<128xf32>
    %7 = vector.multi_reduction <add>, %6, %cst_6 [0] : vector<32x128xf32> to vector<128xf32>
    %8 = vector.shape_cast %7 : vector<128xf32> to vector<1x128xf32>
    %cst_7 = arith.constant 3.125000e-02 : f32
    %9 = vector.broadcast %cst_7 : f32 to vector<1x128xf32>
    %10 = arith.mulf %8, %9 : vector<1x128xf32>
    %11 = vector.broadcast %10 : vector<1x128xf32> to vector<32x128xf32>
    %12 = arith.subf %6, %11 : vector<32x128xf32>
    %13 = arith.mulf %12, %12 : vector<32x128xf32>
    %cst_8 = arith.constant dense<0.000000e+00> : vector<128xf32>
    %14 = vector.multi_reduction <add>, %13, %cst_8 [0] : vector<32x128xf32> to vector<128xf32>
    %15 = vector.shape_cast %14 : vector<128xf32> to vector<1x128xf32>
    %cst_9 = arith.constant 3.125000e-02 : f32
    %16 = vector.broadcast %cst_9 : f32 to vector<1x128xf32>
    %17 = arith.mulf %15, %16 : vector<1x128xf32>
    %cst_10 = arith.constant 9.99999974E-6 : f32
    %18 = vector.broadcast %cst_10 : f32 to vector<1x128xf32>
    %19 = arith.addf %17, %18 : vector<1x128xf32>
    %20 = math.rsqrt %19 : vector<1x128xf32>
    %21 = vector.broadcast %20 : vector<1x128xf32> to vector<32x128xf32>
    %22 = arith.mulf %12, %21 : vector<32x128xf32>
    %c0_11 = arith.constant 0 : index
    %c0_12 = arith.constant 0 : index
    %23 = vector.load %arg5[%c0_11, %c0_12] : memref<32x1xf32, #tpu.memory_space<vmem>>, vector<32x1xf32>
    %24 = vector.broadcast %23 : vector<32x1xf32> to vector<32x128xf32>
    %25 = arith.mulf %22, %24 : vector<32x128xf32>
    %c0_13 = arith.constant 0 : index
    %c0_14 = arith.constant 0 : index
    %26 = vector.load %arg6[%c0_13, %c0_14] : memref<32x1xf32, #tpu.memory_space<vmem>>, vector<32x1xf32>
    %27 = vector.broadcast %26 : vector<32x1xf32> to vector<32x128xf32>
    %28 = arith.addf %25, %27 : vector<32x128xf32>
    %cst_15 = arith.constant 0.000000e+00 : f32
    %29 = vector.broadcast %cst_15 : f32 to vector<32x128xf32>
    %30 = arith.maximumf %28, %29 : vector<32x128xf32>
    %c0_16 = arith.constant 0 : index
    %c0_17 = arith.constant 0 : index
    %31 = vector.load %arg7[%c0_16, %c0_17] : memref<16x32xf32, #tpu.memory_space<vmem>>, vector<16x32xf32>
    %cst_18 = arith.constant dense<0.000000e+00> : vector<16x128xf32>
    %32 = tpu.matmul %31, %30, %cst_18 {dimension_numbers = #tpu.dot_dimension_numbers<[1], [0], [0], [1], [0, 0, 1, 1], [], []>} : vector<16x32xf32>, vector<32x128xf32>, vector<16x128xf32> -> vector<16x128xf32>
    %c0_19 = arith.constant 0 : index
    %c0_20 = arith.constant 0 : index
    %33 = vector.load %arg8[%c0_19, %c0_20] : memref<16x1xf32, #tpu.memory_space<vmem>>, vector<16x1xf32>
    %34 = vector.broadcast %33 : vector<16x1xf32> to vector<16x128xf32>
    %35 = arith.addf %32, %34 : vector<16x128xf32>
    %cst_21 = arith.constant dense<0.000000e+00> : vector<128xf32>
    %36 = vector.multi_reduction <add>, %35, %cst_21 [0] : vector<16x128xf32> to vector<128xf32>
    %37 = vector.shape_cast %36 : vector<128xf32> to vector<1x128xf32>
    %cst_22 = arith.constant 6.250000e-02 : f32
    %38 = vector.broadcast %cst_22 : f32 to vector<1x128xf32>
    %39 = arith.mulf %37, %38 : vector<1x128xf32>
    %40 = vector.broadcast %39 : vector<1x128xf32> to vector<16x128xf32>
    %41 = arith.subf %35, %40 : vector<16x128xf32>
    %42 = arith.mulf %41, %41 : vector<16x128xf32>
    %cst_23 = arith.constant dense<0.000000e+00> : vector<128xf32>
    %43 = vector.multi_reduction <add>, %42, %cst_23 [0] : vector<16x128xf32> to vector<128xf32>
    %44 = vector.shape_cast %43 : vector<128xf32> to vector<1x128xf32>
    %cst_24 = arith.constant 6.250000e-02 : f32
    %45 = vector.broadcast %cst_24 : f32 to vector<1x128xf32>
    %46 = arith.mulf %44, %45 : vector<1x128xf32>
    %cst_25 = arith.constant 9.99999974E-6 : f32
    %47 = vector.broadcast %cst_25 : f32 to vector<1x128xf32>
    %48 = arith.addf %46, %47 : vector<1x128xf32>
    %49 = math.rsqrt %48 : vector<1x128xf32>
    %50 = vector.broadcast %49 : vector<1x128xf32> to vector<16x128xf32>
    %51 = arith.mulf %41, %50 : vector<16x128xf32>
    %c0_26 = arith.constant 0 : index
    %c0_27 = arith.constant 0 : index
    %52 = vector.load %arg9[%c0_26, %c0_27] : memref<16x1xf32, #tpu.memory_space<vmem>>, vector<16x1xf32>
    %53 = vector.broadcast %52 : vector<16x1xf32> to vector<16x128xf32>
    %54 = arith.mulf %51, %53 : vector<16x128xf32>
    %c0_28 = arith.constant 0 : index
    %c0_29 = arith.constant 0 : index
    %55 = vector.load %arg10[%c0_28, %c0_29] : memref<16x1xf32, #tpu.memory_space<vmem>>, vector<16x1xf32>
    %56 = vector.broadcast %55 : vector<16x1xf32> to vector<16x128xf32>
    %57 = arith.addf %54, %56 : vector<16x128xf32>
    %cst_30 = arith.constant 0.000000e+00 : f32
    %58 = vector.broadcast %cst_30 : f32 to vector<16x128xf32>
    %59 = arith.maximumf %57, %58 : vector<16x128xf32>
    %c0_31 = arith.constant 0 : index
    %c0_32 = arith.constant 0 : index
    %60 = vector.load %arg11[%c0_31, %c0_32] : memref<16x16xf32, #tpu.memory_space<vmem>>, vector<16x16xf32>
    %cst_33 = arith.constant dense<0.000000e+00> : vector<16x128xf32>
    %61 = tpu.matmul %60, %59, %cst_33 {dimension_numbers = #tpu.dot_dimension_numbers<[1], [0], [0], [1], [0, 0, 1, 1], [], []>} : vector<16x16xf32>, vector<16x128xf32>, vector<16x128xf32> -> vector<16x128xf32>
    %c0_34 = arith.constant 0 : index
    %c0_35 = arith.constant 0 : index
    %62 = vector.load %arg12[%c0_34, %c0_35] : memref<16x1xf32, #tpu.memory_space<vmem>>, vector<16x1xf32>
    %63 = vector.broadcast %62 : vector<16x1xf32> to vector<16x128xf32>
    %64 = arith.addf %61, %63 : vector<16x128xf32>
    %cst_36 = arith.constant dense<0.000000e+00> : vector<128xf32>
    %65 = vector.multi_reduction <add>, %64, %cst_36 [0] : vector<16x128xf32> to vector<128xf32>
    %66 = vector.shape_cast %65 : vector<128xf32> to vector<1x128xf32>
    %cst_37 = arith.constant 6.250000e-02 : f32
    %67 = vector.broadcast %cst_37 : f32 to vector<1x128xf32>
    %68 = arith.mulf %66, %67 : vector<1x128xf32>
    %69 = vector.broadcast %68 : vector<1x128xf32> to vector<16x128xf32>
    %70 = arith.subf %64, %69 : vector<16x128xf32>
    %71 = arith.mulf %70, %70 : vector<16x128xf32>
    %cst_38 = arith.constant dense<0.000000e+00> : vector<128xf32>
    %72 = vector.multi_reduction <add>, %71, %cst_38 [0] : vector<16x128xf32> to vector<128xf32>
    %73 = vector.shape_cast %72 : vector<128xf32> to vector<1x128xf32>
    %cst_39 = arith.constant 6.250000e-02 : f32
    %74 = vector.broadcast %cst_39 : f32 to vector<1x128xf32>
    %75 = arith.mulf %73, %74 : vector<1x128xf32>
    %cst_40 = arith.constant 9.99999974E-6 : f32
    %76 = vector.broadcast %cst_40 : f32 to vector<1x128xf32>
    %77 = arith.addf %75, %76 : vector<1x128xf32>
    %78 = math.rsqrt %77 : vector<1x128xf32>
    %79 = vector.broadcast %78 : vector<1x128xf32> to vector<16x128xf32>
    %80 = arith.mulf %70, %79 : vector<16x128xf32>
    %c0_41 = arith.constant 0 : index
    %c0_42 = arith.constant 0 : index
    %81 = vector.load %arg13[%c0_41, %c0_42] : memref<16x1xf32, #tpu.memory_space<vmem>>, vector<16x1xf32>
    %82 = vector.broadcast %81 : vector<16x1xf32> to vector<16x128xf32>
    %83 = arith.mulf %80, %82 : vector<16x128xf32>
    %c0_43 = arith.constant 0 : index
    %c0_44 = arith.constant 0 : index
    %84 = vector.load %arg14[%c0_43, %c0_44] : memref<16x1xf32, #tpu.memory_space<vmem>>, vector<16x1xf32>
    %85 = vector.broadcast %84 : vector<16x1xf32> to vector<16x128xf32>
    %86 = arith.addf %83, %85 : vector<16x128xf32>
    %cst_45 = arith.constant 0.000000e+00 : f32
    %87 = vector.broadcast %cst_45 : f32 to vector<16x128xf32>
    %88 = arith.maximumf %86, %87 : vector<16x128xf32>
    %c0_46 = arith.constant 0 : index
    %c0_47 = arith.constant 0 : index
    %89 = vector.load %arg15[%c0_46, %c0_47] : memref<8x16xf32, #tpu.memory_space<vmem>>, vector<8x16xf32>
    %cst_48 = arith.constant dense<0.000000e+00> : vector<8x128xf32>
    %90 = tpu.matmul %89, %88, %cst_48 {dimension_numbers = #tpu.dot_dimension_numbers<[1], [0], [0], [1], [0, 0, 1, 1], [], []>} : vector<8x16xf32>, vector<16x128xf32>, vector<8x128xf32> -> vector<8x128xf32>
    %c0_49 = arith.constant 0 : index
    %c0_50 = arith.constant 0 : index
    %91 = vector.load %arg16[%c0_49, %c0_50] : memref<8x1xf32, #tpu.memory_space<vmem>>, vector<8x1xf32>
    %92 = vector.broadcast %91 : vector<8x1xf32> to vector<8x128xf32>
    %93 = arith.addf %90, %92 : vector<8x128xf32>
    %c0_51 = arith.constant 0 : index
    %c0_52 = arith.constant 0 : index
    %c0_53 = arith.constant 0 : index
    %94 = vector.load %arg17[%c0_51, %c0_52, %c0_53] : memref<1x8x128xf32, #tpu.memory_space<vmem>>, vector<1x8x128xf32>
    %95 = vector.shape_cast %94 : vector<1x8x128xf32> to vector<8x128xf32>
    %96 = vector.shape_cast %93 : vector<8x128xf32> to vector<1x8x128xf32>
    tpu.vector_store %arg17[%c0_51, %c0_52, %c0_53], %96 {strides = array<i32>} : memref<1x8x128xf32, #tpu.memory_space<vmem>>, vector<1x8x128xf32>,
    return
  }
  func.func @transform_0(%arg0: i32, %arg1: i32) -> (i32, i32, i32) {
    %c0_i32 = arith.constant 0 : i32
    %c0_i32_0 = arith.constant 0 : i32
    return %arg0, %c0_i32, %arg1 : i32, i32, i32
  }
  func.func @transform_1(%arg0: i32, %arg1: i32) -> (i32, i32) {
    %c0_i32 = arith.constant 0 : i32
    %c0_i32_0 = arith.constant 0 : i32
    %c0_i32_1 = arith.constant 0 : i32
    return %c0_i32, %c0_i32_0 : i32, i32
  }
  func.func @transform_2(%arg0: i32, %arg1: i32) -> (i32, i32) {
    %c0_i32 = arith.constant 0 : i32
    %c0_i32_0 = arith.constant 0 : i32
    %c0_i32_1 = arith.constant 0 : i32
    return %c0_i32, %c0_i32_0 : i32, i32
  }
  func.func @transform_3(%arg0: i32, %arg1: i32) -> (i32, i32) {
    %c0_i32 = arith.constant 0 : i32
    %c0_i32_0 = arith.constant 0 : i32
    %c0_i32_1 = arith.constant 0 : i32
    return %c0_i32, %c0_i32_0 : i32, i32
  }
  func.func @transform_4(%arg0: i32, %arg1: i32) -> (i32, i32) {
    %c0_i32 = arith.constant 0 : i32
    %c0_i32_0 = arith.constant 0 : i32
    %c0_i32_1 = arith.constant 0 : i32
    return %c0_i32, %c0_i32_0 : i32, i32
  }
  func.func @transform_5(%arg0: i32, %arg1: i32) -> (i32, i32) {
    %c0_i32 = arith.constant 0 : i32
    %c0_i32_0 = arith.constant 0 : i32
    %c0_i32_1 = arith.constant 0 : i32
    return %c0_i32, %c0_i32_0 : i32, i32
  }
  func.func @transform_6(%arg0: i32, %arg1: i32) -> (i32, i32) {
    %c0_i32 = arith.constant 0 : i32
    %c0_i32_0 = arith.constant 0 : i32
    %c0_i32_1 = arith.constant 0 : i32
    return %c0_i32, %c0_i32_0 : i32, i32
  }
  func.func @transform_7(%arg0: i32, %arg1: i32) -> (i32, i32) {
    %c0_i32 = arith.constant 0 : i32
    %c0_i32_0 = arith.constant 0 : i32
    %c0_i32_1 = arith.constant 0 : i32
    return %c0_i32, %c0_i32_0 : i32, i32
  }
  func.func @transform_8(%arg0: i32, %arg1: i32) -> (i32, i32) {
    %c0_i32 = arith.constant 0 : i32
    %c0_i32_0 = arith.constant 0 : i32
    %c0_i32_1 = arith.constant 0 : i32
    return %c0_i32, %c0_i32_0 : i32, i32
  }
  func.func @transform_9(%arg0: i32, %arg1: i32) -> (i32, i32) {
    %c0_i32 = arith.constant 0 : i32
    %c0_i32_0 = arith.constant 0 : i32
    %c0_i32_1 = arith.constant 0 : i32
    return %c0_i32, %c0_i32_0 : i32, i32
  }
  func.func @transform_10(%arg0: i32, %arg1: i32) -> (i32, i32) {
    %c0_i32 = arith.constant 0 : i32
    %c0_i32_0 = arith.constant 0 : i32
    %c0_i32_1 = arith.constant 0 : i32
    return %c0_i32, %c0_i32_0 : i32, i32
  }
  func.func @transform_11(%arg0: i32, %arg1: i32) -> (i32, i32) {
    %c0_i32 = arith.constant 0 : i32
    %c0_i32_0 = arith.constant 0 : i32
    %c0_i32_1 = arith.constant 0 : i32
    return %c0_i32, %c0_i32_0 : i32, i32
  }
  func.func @transform_12(%arg0: i32, %arg1: i32) -> (i32, i32) {
    %c0_i32 = arith.constant 0 : i32
    %c0_i32_0 = arith.constant 0 : i32
    %c0_i32_1 = arith.constant 0 : i32
    return %c0_i32, %c0_i32_0 : i32, i32
  }
  func.func @transform_13(%arg0: i32, %arg1: i32) -> (i32, i32) {
    %c0_i32 = arith.constant 0 : i32
    %c0_i32_0 = arith.constant 0 : i32
    %c0_i32_1 = arith.constant 0 : i32
    return %c0_i32, %c0_i32_0 : i32, i32
  }
  func.func @transform_14(%arg0: i32, %arg1: i32) -> (i32, i32) {
    %c0_i32 = arith.constant 0 : i32
    %c0_i32_0 = arith.constant 0 : i32
    %c0_i32_1 = arith.constant 0 : i32
    return %c0_i32, %c0_i32_0 : i32, i32
  }
  func.func @transform_15(%arg0: i32, %arg1: i32) -> (i32, i32, i32) {
    %c0_i32 = arith.constant 0 : i32
    %c0_i32_0 = arith.constant 0 : i32
    return %arg0, %c0_i32, %arg1 : i32, i32, i32
  }
}

</mosaic_0001>

<llo_original>
// kernel: tpu_custom_call.1
$region0: #{tpu_custom_call.1}
  #allocation0 [shape = 'u32[]', space=smem, size = 0x4, offset = 0x4, fixed_abs, tag = 'smem constant byte address 0x4 - core index']
  #allocation1 [shape = 'u32[144,128]{1,0:T(1,128)}', space=vmem, size = 0x12000, scoped, tag = 'internal scratch']
  %s0 = inlined_call_operand.vmem [shape: f32[2,32,128], index: 0, kind: input, shape index: {}]
  %s1 = inlined_call_operand.vmem [shape: f32[32,32], index: 1, kind: input, shape index: {}]
  %s2 = inlined_call_operand.vmem [shape: f32[32,1], index: 2, kind: input, shape index: {}]
  %s3 = inlined_call_operand.vmem [shape: f32[32,1], index: 3, kind: input, shape index: {}]
  %s4 = inlined_call_operand.vmem [shape: f32[32,1], index: 4, kind: input, shape index: {}]
  %s5 = inlined_call_operand.vmem [shape: f32[16,32], index: 5, kind: input, shape index: {}]
  %s6 = inlined_call_operand.vmem [shape: f32[16,1], index: 6, kind: input, shape index: {}]
  %s7 = inlined_call_operand.vmem [shape: f32[16,1], index: 7, kind: input, shape index: {}]
  %s8 = inlined_call_operand.vmem [shape: f32[16,1], index: 8, kind: input, shape index: {}]
  %s9 = inlined_call_operand.vmem [shape: f32[16,16], index: 9, kind: input, shape index: {}]
  %s10 = inlined_call_operand.vmem [shape: f32[16,1], index: 10, kind: input, shape index: {}]
  %s11 = inlined_call_operand.vmem [shape: f32[16,1], index: 11, kind: input, shape index: {}]
  %s12 = inlined_call_operand.vmem [shape: f32[16,1], index: 12, kind: input, shape index: {}]
  %s13 = inlined_call_operand.vmem [shape: f32[8,16], index: 13, kind: input, shape index: {}]
  %s14 = inlined_call_operand.vmem [shape: f32[8,1], index: 14, kind: input, shape index: {}]
  %s15 = inlined_call_operand.hbm [shape: f32[2,8,128], index: 15, kind: output, shape index: {}]
  %s16 = sld [smem:[#allocation0]]
  $region93: #{tpu_custom_call.1} parent=0
    _
  %s18 = ssub.s32 1, %s16
  %s19 = scalar_select 0, %s18, %s16
  $region1: #{tpu_custom_call.1} parent=0
    #allocation2 [shape = 'u8[8192]{0}', space=vmem, size = 0x2000, scoped, tag = 'output window, operand 0']
    #allocation3 [shape = 's32[2]{0}', space=sflag, size = 0x8, scoped, tag = 'scoped memory for tpu_custom_call.1']
    %20 = vsyncpa [#allocation3], 0
    %s21 = scalar_lea.sflag [#allocation3], 1
    %22 = vsyncpa %s21, 0
    loop: start=0, step=1, limit=4
    $region2: #{tpu_custom_call.1} parent=1 // loop_pre_header
      _
    $region3: #{tpu_custom_call.1} parent=1 // loop_header
      %s24 = sphi 0, %s28
      %p25 = scmp.ge.s32.totalorder %s24, 4
      %s31 = sphi 0, %s43
      %s32 = sphi 0, %s39
      %s33 = sphi 0, %s31
      %s34 = sphi 0, %s32
      %s35 = sphi 0, %s33
      %s36 = sphi 0, %s34
      %s48 = sphi 0, %s50
      %s51 = sphi 0, %s48
      %s52 = sphi 0, %s51
      %s68 = sphi 0, %s52
      %s72 = sphi 0, %s72
      %s74 = sphi 0, %s72
      %s75 = sphi 0, %s74
      %s89 = sphi 0, %s75
      %s93 = sphi 0, %s93
      %s95 = sphi 0, %s93
      %s96 = sphi 0, %s95
      %s110 = sphi 0, %s96
      %s114 = sphi 0, %s114
      %s116 = sphi 0, %s114
      %s117 = sphi 0, %s116
      %s131 = sphi 0, %s117
      %s135 = sphi 0, %s135
      %s137 = sphi 0, %s135
      %s138 = sphi 0, %s137
      %s152 = sphi 0, %s138
      %s156 = sphi 0, %s156
      %s158 = sphi 0, %s156
      %s159 = sphi 0, %s158
      %s173 = sphi 0, %s159
      %s177 = sphi 0, %s177
      %s179 = sphi 0, %s177
      %s180 = sphi 0, %s179
      %s194 = sphi 0, %s180
      %s198 = sphi 0, %s198
      %s200 = sphi 0, %s198
      %s201 = sphi 0, %s200
      %s215 = sphi 0, %s201
      %s219 = sphi 0, %s219
      %s221 = sphi 0, %s219
      %s222 = sphi 0, %s221
      %s236 = sphi 0, %s222
      %s240 = sphi 0, %s240
      %s242 = sphi 0, %s240
      %s243 = sphi 0, %s242
      %s257 = sphi 0, %s243
      %s261 = sphi 0, %s261
      %s263 = sphi 0, %s261
      %s264 = sphi 0, %s263
      %s278 = sphi 0, %s264
      %s282 = sphi 0, %s282
      %s284 = sphi 0, %s282
      %s285 = sphi 0, %s284
      %s299 = sphi 0, %s285
      %s303 = sphi 0, %s303
      %s305 = sphi 0, %s303
      %s306 = sphi 0, %s305
      %s320 = sphi 0, %s306
      %s324 = sphi 0, %s324
      %s326 = sphi 0, %s324
      %s327 = sphi 0, %s326
      %s341 = sphi 0, %s327
      %s345 = sphi 0, %s345
      %s347 = sphi 0, %s345
      %s348 = sphi 0, %s347
      %s362 = sphi 0, %s348
      %s370 = sphi 0, %s372
      %s373 = sphi 0, %s370
      %s374 = sphi 0, %s373
      %s390 = sphi 0, %s374
    $region4: #{tpu_custom_call.1} parent=1 // loop_header_branch
      %27 = sbr.rel (%p25) target = $region8
    $region5: #{tpu_custom_call.1} parent=1 // loop_body
      %s29 = ssub.s32 %s24, 1
      %s30 = ssub.s32 %s24, 2
      %s37 = sadd.s32 1, %s32
      %p38 = scmp.ge.s32.totalorder %s37, 1
      %s39 = scalar_select %p38, 0, %s37
      %s40 = sadd.s32 1, %s31
      %s41 = scalar_select %p38, %s40, %s31
      %p42 = scmp.ge.s32.totalorder %s41, 2
      %s43 = scalar_select %p42, 0, %s41
      %s44 = ssub.s32 %s31, %s43
      %s45 = ssub.s32 %s32, %s39
      %s46 = sor.u32 %s44, %s45
      %p47 = scmp.eq.s32.totalorder %s46, 0
      %s49 = sadd.s32 %s48, 1
      %s50 = scalar_select %p47, %s48, %s49
      %p53 = pneg %p47
      %p54 = scmp.eq.s32.totalorder %s24, 1
      %p55 = por %p53, %p54
      %p56 = scmp.ne.s32.totalorder %s48, %s51
      %p57 = scmp.eq.s32.totalorder %s24, 0
      %p58 = por %p56, %p57
      %p59 = scmp.ne.s32.totalorder %s48, %s51
      %p60 = scmp.eq.s32.totalorder %s29, 1
      %p61 = por %p59, %p60
      %p62 = scmp.ne.s32.totalorder %s51, %s52
      %p63 = scmp.eq.s32.totalorder %s29, 0
      %p64 = por %p62, %p63
      %p65 = scmp.ne.s32.totalorder %s51, %s52
      %p66 = scmp.eq.s32.totalorder %s30, 1
      %p67 = por %p65, %p66
      %p69 = scmp.ne.s32.totalorder %s52, %s68
      %p70 = scmp.eq.s32.totalorder %s30, 0
      %p71 = por %p69, %p70
      %s73 = sadd.s32 %s72, 1
      %p76 = scmp.eq.s32.totalorder %s24, 1
      %p77 = scmp.ne.s32.totalorder %s72, %s74
      %p78 = scmp.eq.s32.totalorder %s24, 0
      %p79 = por %p77, %p78
      %p80 = scmp.ne.s32.totalorder %s72, %s74
      %p81 = scmp.eq.s32.totalorder %s29, 1
      %p82 = por %p80, %p81
      %p83 = scmp.ne.s32.totalorder %s74, %s75
      %p84 = scmp.eq.s32.totalorder %s29, 0
      %p85 = por %p83, %p84
      %p86 = scmp.ne.s32.totalorder %s74, %s75
      %p87 = scmp.eq.s32.totalorder %s30, 1
      %p88 = por %p86, %p87
      %p90 = scmp.ne.s32.totalorder %s75, %s89
      %p91 = scmp.eq.s32.totalorder %s30, 0
      %p92 = por %p90, %p91
      %s94 = sadd.s32 %s93, 1
      %p97 = scmp.eq.s32.totalorder %s24, 1
      %p98 = scmp.ne.s32.totalorder %s93, %s95
      %p99 = scmp.eq.s32.totalorder %s24, 0
      %p100 = por %p98, %p99
      %p101 = scmp.ne.s32.totalorder %s93, %s95
      %p102 = scmp.eq.s32.totalorder %s29, 1
      %p103 = por %p101, %p102
      %p104 = scmp.ne.s32.totalorder %s95, %s96
      %p105 = scmp.eq.s32.totalorder %s29, 0
      %p106 = por %p104, %p105
      %p107 = scmp.ne.s32.totalorder %s95, %s96
      %p108 = scmp.eq.s32.totalorder %s30, 1
      %p109 = por %p107, %p108
      %p111 = scmp.ne.s32.totalorder %s96, %s110
      %p112 = scmp.eq.s32.totalorder %s30, 0
      %p113 = por %p111, %p112
      %s115 = sadd.s32 %s114, 1
      %p118 = scmp.eq.s32.totalorder %s24, 1
      %p119 = scmp.ne.s32.totalorder %s114, %s116
      %p120 = scmp.eq.s32.totalorder %s24, 0
      %p121 = por %p119, %p120
      %p122 = scmp.ne.s32.totalorder %s114, %s116
      %p123 = scmp.eq.s32.totalorder %s29, 1
      %p124 = por %p122, %p123
      %p125 = scmp.ne.s32.totalorder %s116, %s117
      %p126 = scmp.eq.s32.totalorder %s29, 0
      %p127 = por %p125, %p126
      %p128 = scmp.ne.s32.totalorder %s116, %s117
      %p129 = scmp.eq.s32.totalorder %s30, 1
      %p130 = por %p128, %p129
      %p132 = scmp.ne.s32.totalorder %s117, %s131
      %p133 = scmp.eq.s32.totalorder %s30, 0
      %p134 = por %p132, %p133
      %s136 = sadd.s32 %s135, 1
      %p139 = scmp.eq.s32.totalorder %s24, 1
      %p140 = scmp.ne.s32.totalorder %s135, %s137
      %p141 = scmp.eq.s32.totalorder %s24, 0
      %p142 = por %p140, %p141
      %p143 = scmp.ne.s32.totalorder %s135, %s137
      %p144 = scmp.eq.s32.totalorder %s29, 1
      %p145 = por %p143, %p144
      %p146 = scmp.ne.s32.totalorder %s137, %s138
      %p147 = scmp.eq.s32.totalorder %s29, 0
      %p148 = por %p146, %p147
      %p149 = scmp.ne.s32.totalorder %s137, %s138
      %p150 = scmp.eq.s32.totalorder %s30, 1
      %p151 = por %p149, %p150
      %p153 = scmp.ne.s32.totalorder %s138, %s152
      %p154 = scmp.eq.s32.totalorder %s30, 0
      %p155 = por %p153, %p154
      %s157 = sadd.s32 %s156, 1
      %p160 = scmp.eq.s32.totalorder %s24, 1
      %p161 = scmp.ne.s32.totalorder %s156, %s158
      %p162 = scmp.eq.s32.totalorder %s24, 0
      %p163 = por %p161, %p162
      %p164 = scmp.ne.s32.totalorder %s156, %s158
      %p165 = scmp.eq.s32.totalorder %s29, 1
      %p166 = por %p164, %p165
      %p167 = scmp.ne.s32.totalorder %s158, %s159
      %p168 = scmp.eq.s32.totalorder %s29, 0
      %p169 = por %p167, %p168
      %p170 = scmp.ne.s32.totalorder %s158, %s159
      %p171 = scmp.eq.s32.totalorder %s30, 1
      %p172 = por %p170, %p171
      %p174 = scmp.ne.s32.totalorder %s159, %s173
      %p175 = scmp.eq.s32.totalorder %s30, 0
      %p176 = por %p174, %p175
      %s178 = sadd.s32 %s177, 1
      %p181 = scmp.eq.s32.totalorder %s24, 1
      %p182 = scmp.ne.s32.totalorder %s177, %s179
      %p183 = scmp.eq.s32.totalorder %s24, 0
      %p184 = por %p182, %p183
      %p185 = scmp.ne.s32.totalorder %s177, %s179
      %p186 = scmp.eq.s32.totalorder %s29, 1
      %p187 = por %p185, %p186
      %p188 = scmp.ne.s32.totalorder %s179, %s180
      %p189 = scmp.eq.s32.totalorder %s29, 0
      %p190 = por %p188, %p189
      %p191 = scmp.ne.s32.totalorder %s179, %s180
      %p192 = scmp.eq.s32.totalorder %s30, 1
      %p193 = por %p191, %p192
      %p195 = scmp.ne.s32.totalorder %s180, %s194
      %p196 = scmp.eq.s32.totalorder %s30, 0
      %p197 = por %p195, %p196
      %s199 = sadd.s32 %s198, 1
      %p202 = scmp.eq.s32.totalorder %s24, 1
      %p203 = scmp.ne.s32.totalorder %s198, %s200
      %p204 = scmp.eq.s32.totalorder %s24, 0
      %p205 = por %p203, %p204
      %p206 = scmp.ne.s32.totalorder %s198, %s200
      %p207 = scmp.eq.s32.totalorder %s29, 1
      %p208 = por %p206, %p207
      %p209 = scmp.ne.s32.totalorder %s200, %s201
      %p210 = scmp.eq.s32.totalorder %s29, 0
      %p211 = por %p209, %p210
      %p212 = scmp.ne.s32.totalorder %s200, %s201
      %p213 = scmp.eq.s32.totalorder %s30, 1
      %p214 = por %p212, %p213
      %p216 = scmp.ne.s32.totalorder %s201, %s215
      %p217 = scmp.eq.s32.totalorder %s30, 0
      %p218 = por %p216, %p217
      %s220 = sadd.s32 %s219, 1
      %p223 = scmp.eq.s32.totalorder %s24, 1
      %p224 = scmp.ne.s32.totalorder %s219, %s221
      %p225 = scmp.eq.s32.totalorder %s24, 0
      %p226 = por %p224, %p225
      %p227 = scmp.ne.s32.totalorder %s219, %s221
      %p228 = scmp.eq.s32.totalorder %s29, 1
      %p229 = por %p227, %p228
      %p230 = scmp.ne.s32.totalorder %s221, %s222
      %p231 = scmp.eq.s32.totalorder %s29, 0
      %p232 = por %p230, %p231
      %p233 = scmp.ne.s32.totalorder %s221, %s222
      %p234 = scmp.eq.s32.totalorder %s30, 1
      %p235 = por %p233, %p234
      %p237 = scmp.ne.s32.totalorder %s222, %s236
      %p238 = scmp.eq.s32.totalorder %s30, 0
      %p239 = por %p237, %p238
      %s241 = sadd.s32 %s240, 1
      %p244 = scmp.eq.s32.totalorder %s24, 1
      %p245 = scmp.ne.s32.totalorder %s240, %s242
      %p246 = scmp.eq.s32.totalorder %s24, 0
      %p247 = por %p245, %p246
      %p248 = scmp.ne.s32.totalorder %s240, %s242
      %p249 = scmp.eq.s32.totalorder %s29, 1
      %p250 = por %p248, %p249
      %p251 = scmp.ne.s32.totalorder %s242, %s243
      %p252 = scmp.eq.s32.totalorder %s29, 0
      %p253 = por %p251, %p252
      %p254 = scmp.ne.s32.totalorder %s242, %s243
      %p255 = scmp.eq.s32.totalorder %s30, 1
      %p256 = por %p254, %p255
      %p258 = scmp.ne.s32.totalorder %s243, %s257
      %p259 = scmp.eq.s32.totalorder %s30, 0
      %p260 = por %p258, %p259
      %s262 = sadd.s32 %s261, 1
      %p265 = scmp.eq.s32.totalorder %s24, 1
      %p266 = scmp.ne.s32.totalorder %s261, %s263
      %p267 = scmp.eq.s32.totalorder %s24, 0
      %p268 = por %p266, %p267
      %p269 = scmp.ne.s32.totalorder %s261, %s263
      %p270 = scmp.eq.s32.totalorder %s29, 1
      %p271 = por %p269, %p270
      %p272 = scmp.ne.s32.totalorder %s263, %s264
      %p273 = scmp.eq.s32.totalorder %s29, 0
      %p274 = por %p272, %p273
      %p275 = scmp.ne.s32.totalorder %s263, %s264
      %p276 = scmp.eq.s32.totalorder %s30, 1
      %p277 = por %p275, %p276
      %p279 = scmp.ne.s32.totalorder %s264, %s278
      %p280 = scmp.eq.s32.totalorder %s30, 0
      %p281 = por %p279, %p280
      %s283 = sadd.s32 %s282, 1
      %p286 = scmp.eq.s32.totalorder %s24, 1
      %p287 = scmp.ne.s32.totalorder %s282, %s284
      %p288 = scmp.eq.s32.totalorder %s24, 0
      %p289 = por %p287, %p288
      %p290 = scmp.ne.s32.totalorder %s282, %s284
      %p291 = scmp.eq.s32.totalorder %s29, 1
      %p292 = por %p290, %p291
      %p293 = scmp.ne.s32.totalorder %s284, %s285
      %p294 = scmp.eq.s32.totalorder %s29, 0
      %p295 = por %p293, %p294
      %p296 = scmp.ne.s32.totalorder %s284, %s285
      %p297 = scmp.eq.s32.totalorder %s30, 1
      %p298 = por %p296, %p297
      %p300 = scmp.ne.s32.totalorder %s285, %s299
      %p301 = scmp.eq.s32.totalorder %s30, 0
      %p302 = por %p300, %p301
      %s304 = sadd.s32 %s303, 1
      %p307 = scmp.eq.s32.totalorder %s24, 1
      %p308 = scmp.ne.s32.totalorder %s303, %s305
      %p309 = scmp.eq.s32.totalorder %s24, 0
      %p310 = por %p308, %p309
      %p311 = scmp.ne.s32.totalorder %s303, %s305
      %p312 = scmp.eq.s32.totalorder %s29, 1
      %p313 = por %p311, %p312
      %p314 = scmp.ne.s32.totalorder %s305, %s306
      %p315 = scmp.eq.s32.totalorder %s29, 0
      %p316 = por %p314, %p315
      %p317 = scmp.ne.s32.totalorder %s305, %s306
      %p318 = scmp.eq.s32.totalorder %s30, 1
      %p319 = por %p317, %p318
      %p321 = scmp.ne.s32.totalorder %s306, %s320
      %p322 = scmp.eq.s32.totalorder %s30, 0
      %p323 = por %p321, %p322
      %s325 = sadd.s32 %s324, 1
      %p328 = scmp.eq.s32.totalorder %s24, 1
      %p329 = scmp.ne.s32.totalorder %s324, %s326
      %p330 = scmp.eq.s32.totalorder %s24, 0
      %p331 = por %p329, %p330
      %p332 = scmp.ne.s32.totalorder %s324, %s326
      %p333 = scmp.eq.s32.totalorder %s29, 1
      %p334 = por %p332, %p333
      %p335 = scmp.ne.s32.totalorder %s326, %s327
      %p336 = scmp.eq.s32.totalorder %s29, 0
      %p337 = por %p335, %p336
      %p338 = scmp.ne.s32.totalorder %s326, %s327
      %p339 = scmp.eq.s32.totalorder %s30, 1
      %p340 = por %p338, %p339
      %p342 = scmp.ne.s32.totalorder %s327, %s341
      %p343 = scmp.eq.s32.totalorder %s30, 0
      %p344 = por %p342, %p343
      %s346 = sadd.s32 %s345, 1
      %p349 = scmp.eq.s32.totalorder %s24, 1
      %p350 = scmp.ne.s32.totalorder %s345, %s347
      %p351 = scmp.eq.s32.totalorder %s24, 0
      %p352 = por %p350, %p351
      %p353 = scmp.ne.s32.totalorder %s345, %s347
      %p354 = scmp.eq.s32.totalorder %s29, 1
      %p355 = por %p353, %p354
      %p356 = scmp.ne.s32.totalorder %s347, %s348
      %p357 = scmp.eq.s32.totalorder %s29, 0
      %p358 = por %p356, %p357
      %p359 = scmp.ne.s32.totalorder %s347, %s348
      %p360 = scmp.eq.s32.totalorder %s30, 1
      %p361 = por %p359, %p360
      %p363 = scmp.ne.s32.totalorder %s348, %s362
      %p364 = scmp.eq.s32.totalorder %s30, 0
      %p365 = por %p363, %p364
      %s366 = ssub.s32 %s31, %s43
      %s367 = ssub.s32 %s32, %s39
      %s368 = sor.u32 %s366, %s367
      %p369 = scmp.eq.s32.totalorder %s368, 0
      %s371 = sadd.s32 %s370, 1
      %s372 = scalar_select %p369, %s370, %s371
      %p375 = pneg %p369
      %p376 = scmp.eq.s32.totalorder %s24, 1
      %p377 = por %p375, %p376
      %p378 = scmp.ne.s32.totalorder %s370, %s373
      %p379 = scmp.eq.s32.totalorder %s24, 0
      %p380 = por %p378, %p379
      %p381 = scmp.ne.s32.totalorder %s370, %s373
      %p382 = scmp.eq.s32.totalorder %s29, 1
      %p383 = por %p381, %p382
      %p384 = scmp.ne.s32.totalorder %s373, %s374
      %p385 = scmp.eq.s32.totalorder %s29, 0
      %p386 = por %p384, %p385
      %p387 = scmp.ne.s32.totalorder %s373, %s374
      %p388 = scmp.eq.s32.totalorder %s30, 1
      %p389 = por %p387, %p388
      %p391 = scmp.ne.s32.totalorder %s374, %s390
      %p392 = scmp.eq.s32.totalorder %s30, 0
      %p393 = por %p391, %p392
      %p394 = scmp.le.s32.totalorder 1, %s24
      %p395 = scmp.lt.s32.totalorder %s24, 3
      %p396 = pnand %p394, %p395
      %p397 = pneg %p396
      // Predicated region
      $region9: #{tpu_custom_call.1} parent=5 // pred_check
        _
      $region10: #{tpu_custom_call.1} parent=5 // pred_check_branch
        %399 = sbr.rel (%p396) target = $region12
      $region11: #{tpu_custom_call.1} parent=5 // pred_region
        %s400 = ssub.s32 %s24, 1
        // Predicated region
        $region13: #{tpu_custom_call.1} parent=11 // pred_check
          %p401 = pneg %p85
        $region14: #{tpu_custom_call.1} parent=11 // pred_check_branch
          %403 = sbr.rel (%p401) target = $region16
        $region15: #{tpu_custom_call.1} parent=11 // pred_region
          _
        $region16: #{tpu_custom_call.1} parent=11 // pred_fallthru
          _
        // Predicated region
        $region17: #{tpu_custom_call.1} parent=11 // pred_check
          %p404 = pneg %p106
        $region18: #{tpu_custom_call.1} parent=11 // pred_check_branch
          %406 = sbr.rel (%p404) target = $region20
        $region19: #{tpu_custom_call.1} parent=11 // pred_region
          _
        $region20: #{tpu_custom_call.1} parent=11 // pred_fallthru
          _
        // Predicated region
        $region21: #{tpu_custom_call.1} parent=11 // pred_check
          %p407 = pneg %p127
        $region22: #{tpu_custom_call.1} parent=11 // pred_check_branch
          %409 = sbr.rel (%p407) target = $region24
        $region23: #{tpu_custom_call.1} parent=11 // pred_region
          _
        $region24: #{tpu_custom_call.1} parent=11 // pred_fallthru
          _
        // Predicated region
        $region25: #{tpu_custom_call.1} parent=11 // pred_check
          %p410 = pneg %p148
        $region26: #{tpu_custom_call.1} parent=11 // pred_check_branch
          %412 = sbr.rel (%p410) target = $region28
        $region27: #{tpu_custom_call.1} parent=11 // pred_region
          _
        $region28: #{tpu_custom_call.1} parent=11 // pred_fallthru
          _
        // Predicated region
        $region29: #{tpu_custom_call.1} parent=11 // pred_check
          %p413 = pneg %p169
        $region30: #{tpu_custom_call.1} parent=11 // pred_check_branch
          %415 = sbr.rel (%p413) target = $region32
        $region31: #{tpu_custom_call.1} parent=11 // pred_region
          _
        $region32: #{tpu_custom_call.1} parent=11 // pred_fallthru
          _
        // Predicated region
        $region33: #{tpu_custom_call.1} parent=11 // pred_check
          %p416 = pneg %p190
        $region34: #{tpu_custom_call.1} parent=11 // pred_check_branch
          %418 = sbr.rel (%p416) target = $region36
        $region35: #{tpu_custom_call.1} parent=11 // pred_region
          _
        $region36: #{tpu_custom_call.1} parent=11 // pred_fallthru
          _
        // Predicated region
        $region37: #{tpu_custom_call.1} parent=11 // pred_check
          %p419 = pneg %p211
        $region38: #{tpu_custom_call.1} parent=11 // pred_check_branch
          %421 = sbr.rel (%p419) target = $region40
        $region39: #{tpu_custom_call.1} parent=11 // pred_region
          _
        $region40: #{tpu_custom_call.1} parent=11 // pred_fallthru
          _
        // Predicated region
        $region41: #{tpu_custom_call.1} parent=11 // pred_check
          %p422 = pneg %p232
        $region42: #{tpu_custom_call.1} parent=11 // pred_check_branch
          %424 = sbr.rel (%p422) target = $region44
        $region43: #{tpu_custom_call.1} parent=11 // pred_region
          _
        $region44: #{tpu_custom_call.1} parent=11 // pred_fallthru
          _
        // Predicated region
        $region45: #{tpu_custom_call.1} parent=11 // pred_check
          %p425 = pneg %p253
        $region46: #{tpu_custom_call.1} parent=11 // pred_check_branch
          %427 = sbr.rel (%p425) target = $region48
        $region47: #{tpu_custom_call.1} parent=11 // pred_region
          _
        $region48: #{tpu_custom_call.1} parent=11 // pred_fallthru
          _
        // Predicated region
        $region49: #{tpu_custom_call.1} parent=11 // pred_check
          %p428 = pneg %p274
        $region50: #{tpu_custom_call.1} parent=11 // pred_check_branch
          %430 = sbr.rel (%p428) target = $region52
        $region51: #{tpu_custom_call.1} parent=11 // pred_region
          _
        $region52: #{tpu_custom_call.1} parent=11 // pred_fallthru
          _
        // Predicated region
        $region53: #{tpu_custom_call.1} parent=11 // pred_check
          %p431 = pneg %p295
        $region54: #{tpu_custom_call.1} parent=11 // pred_check_branch
          %433 = sbr.rel (%p431) target = $region56
        $region55: #{tpu_custom_call.1} parent=11 // pred_region
          _
        $region56: #{tpu_custom_call.1} parent=11 // pred_fallthru
          _
        // Predicated region
        $region57: #{tpu_custom_call.1} parent=11 // pred_check
          %p434 = pneg %p316
        $region58: #{tpu_custom_call.1} parent=11 // pred_check_branch
          %436 = sbr.rel (%p434) target = $region60
        $region59: #{tpu_custom_call.1} parent=11 // pred_region
          _
        $region60: #{tpu_custom_call.1} parent=11 // pred_fallthru
          _
        // Predicated region
        $region61: #{tpu_custom_call.1} parent=11 // pred_check
          %p437 = pneg %p337
        $region62: #{tpu_custom_call.1} parent=11 // pred_check_branch
          %439 = sbr.rel (%p437) target = $region64
        $region63: #{tpu_custom_call.1} parent=11 // pred_region
          _
        $region64: #{tpu_custom_call.1} parent=11 // pred_fallthru
          _
        // Predicated region
        $region65: #{tpu_custom_call.1} parent=11 // pred_check
          %p440 = pneg %p358
        $region66: #{tpu_custom_call.1} parent=11 // pred_check_branch
          %442 = sbr.rel (%p440) target = $region68
        $region67: #{tpu_custom_call.1} parent=11 // pred_region
          _
        $region68: #{tpu_custom_call.1} parent=11 // pred_fallthru
          _
      $region12: #{tpu_custom_call.1} parent=5 // pred_fallthru
        _
      %p443 = scmp.lt.s32.totalorder %s24, 2
      // Predicated region
      $region69: #{tpu_custom_call.1} parent=5 // pred_check
        %p444 = pneg %p443
      $region70: #{tpu_custom_call.1} parent=5 // pred_check_branch
        %446 = sbr.rel (%p444) target = $region72
      $region71: #{tpu_custom_call.1} parent=5 // pred_region
        // Predicated region
        $region73: #{tpu_custom_call.1} parent=71 // pred_check
          %p447 = pneg %p58
        $region74: #{tpu_custom_call.1} parent=71 // pred_check_branch
          %449 = sbr.rel (%p447) target = $region76
        $region75: #{tpu_custom_call.1} parent=71 // pred_region
          %p450 = scmp.lt.s32.totalorder %s31, 1
          %s451 = scalar_select %p450, %s31, 1
          %p452 = scmp.lt.s32.totalorder %s32, 0
          %s453 = scalar_select %p452, %s32, 0
          %s454 = smul.addr %s451, 4
          %s455 = sadd.s32 %s453, %s454
          %s456 = smul.addr %s455, 8
          %s457 = scalar_lea.vmem %s0, %s456
        $region76: #{tpu_custom_call.1} parent=71 // pred_fallthru
          _
      $region72: #{tpu_custom_call.1} parent=5 // pred_fallthru
        _
      %p458 = scmp.le.s32.totalorder 1, %s24
      %p459 = scmp.lt.s32.totalorder %s24, 3
      %p460 = pnand %p458, %p459
      %p461 = pneg %p460
      // Predicated region
      $region77: #{tpu_custom_call.1} parent=5 // pred_check
        _
      $region78: #{tpu_custom_call.1} parent=5 // pred_check_branch
        %463 = sbr.rel (%p460) target = $region80
      $region79: #{tpu_custom_call.1} parent=5 // pred_region
        %s464 = ssub.s32 %s24, 1
        %p465 = scmp.lt.s32.totalorder %s33, 1
        %s466 = scalar_select %p465, %s33, 1
        %p467 = scmp.lt.s32.totalorder %s34, 0
        %s468 = scalar_select %p467, %s34, 0
        %s469 = smul.addr %s466, 4
        %s470 = sadd.s32 %s468, %s469
        %s471 = smul.addr %s470, 8
        %s472 = scalar_lea.vmem %s0, %s471
        %p473 = pneg %p64
        %p474 = pneg %p61
        %p475 = pneg %p85
        %p476 = pneg %p82
        %p477 = pneg %p106
        %p478 = pneg %p103
        %p479 = pneg %p127
        %p480 = pneg %p124
        %p481 = pneg %p148
        %p482 = pneg %p145
        %p483 = pneg %p169
        %p484 = pneg %p166
        %p485 = pneg %p190
        %p486 = pneg %p187
        %p487 = pneg %p211
        %p488 = pneg %p208
        %p489 = pneg %p232
        %p490 = pneg %p229
        %p491 = pneg %p253
        %p492 = pneg %p250
        %p493 = pneg %p274
        %p494 = pneg %p271
        %p495 = pneg %p295
        %p496 = pneg %p292
        %p497 = pneg %p316
        %p498 = pneg %p313
        %p499 = pneg %p337
        %p500 = pneg %p334
        %p501 = pneg %p358
        %p502 = pneg %p355
        %p503 = pneg %p386
        %p504 = pneg %p383
        %s505 = sand.u32 %s373, 1
        %s506 = scalar_lea.sflag [#allocation3], %s505
        %s507 = sand.u32 %s373, 1
        %s508 = smul.addr %s507, 8
        %s509 = scalar_lea.vmem [#allocation2], %s508
        %p510 = scmp.lt.s32.totalorder %s33, 1
        %s511 = scalar_select %p510, %s33, 1
        %p512 = scmp.lt.s32.totalorder %s34, 0
        %s513 = scalar_select %p512, %s34, 0
        %s514 = smul.addr %s511, 4
        %s515 = sadd.s32 %s513, %s514
        %s516 = smul.addr %s515, 8
        %s517 = scalar_lea.vmem %s0, %s516
        %v518 = vld [vmem:[%s517] sm:$0xff]
        %v519 = vld [vmem:[%s517 + $0x8] sm:$0xff]
        %v520 = vld [vmem:[%s517 + $0x10] sm:$0xff]
        %v521 = vld [vmem:[%s517 + $0x18] sm:$0xff]
        %v522 = vld [vmem:[%s1] sm:$0xff]
        %v523 = vld [vmem:[%s1 + $0x8] sm:$0xff]
        %v524 = vld [vmem:[%s1 + $0x10] sm:$0xff]
        %v525 = vld [vmem:[%s1 + $0x18] sm:$0xff]
        %v526 = vld [vmem:[%s2] sm:$0xff]
        %v527 = vld [vmem:[%s2 + $0x8] sm:$0xff]
        %v528 = vld [vmem:[%s2 + $0x10] sm:$0xff]
        %v529 = vld [vmem:[%s2 + $0x18] sm:$0xff]
        %531 = vset.pattern.permute.xlu0 0
        %532 = vperm.xlu0 %531, %v526
        %v533 = vpop.permute.xlu0 %532
        %536 = vset.pattern.permute.xlu0 0
        %537 = vperm.xlu0 %536, %v527
        %v538 = vpop.permute.xlu0 %537
        %541 = vset.pattern.permute.xlu0 0
        %542 = vperm.xlu0 %541, %v528
        %v543 = vpop.permute.xlu0 %542
        %546 = vset.pattern.permute.xlu0 0
        %547 = vperm.xlu0 %546, %v529
        %v548 = vpop.permute.xlu0 %547
        %vm550 = vcmask 261120
        %v552 = vsel %vm550, %v522, 0
        %v555 = vsel %vm550, %v523, 0
        %v558 = vsel %vm550, %v524, 0
        %v561 = vsel %vm550, %v525, 0
        %563 = vmatprep.subr.mxu0 0.0
        %564 = vmatpush1.msra.mxu0 %v518
        %565 = vmatprep.subr.mxu0 0.0
        %566 = vmatpush1.msra.mxu0 %v519
        %567 = vmatprep.subr.mxu0 0.0
        %568 = vmatpush1.msra.mxu0 %v520
        %569 = vmatprep.subr.mxu0 0.0
        %570 = vmatpush1.msra.mxu0 %v521
        %571 = vmatprep.subr.mxu0 0.0
        %572 = vmatpush1.msra.mxu0 0.0
        %573 = vmatprep.subr.mxu0 0.0
        %574 = vmatpush1.msra.mxu0 0.0
        %575 = vmatprep.subr.mxu0 0.0
        %576 = vmatpush1.msra.mxu0 0.0
        %577 = vmatprep.subr.mxu0 0.0
        %578 = vmatpush1.msra.mxu0 0.0
        %579 = vmatprep.subr.mxu0 0.0
        %580 = vmatpush1.msra.mxu0 0.0
        %581 = vmatprep.subr.mxu0 0.0
        %582 = vmatpush1.msra.mxu0 0.0
        %583 = vmatprep.subr.mxu0 0.0
        %584 = vmatpush1.msra.mxu0 0.0
        %585 = vmatprep.subr.mxu0 0.0
        %586 = vmatpush1.msra.mxu0 0.0
        %587 = vmatprep.subr.mxu0 0.0
        %588 = vmatpush1.msra.mxu0 0.0
        %589 = vmatprep.subr.mxu0 0.0
        %590 = vmatpush1.msra.mxu0 0.0
        %591 = vmatprep.subr.mxu0 0.0
        %592 = vmatpush1.msra.mxu0 0.0
        %593 = vmatprep.subr.mxu0 0.0
        %594 = vmatpush1.msra.mxu0 0.0
        %595 = vmatprep.subr.mxu0 0.0
        %596 = vmatpush1.msra.mxu0 0.0
        %597 = vmatprep.subr.mxu0 0.0
        %598 = vmatpush1.msra.mxu0 0.0
        %599 = vmatprep.subr.mxu0 0.0
        %600 = vmatpush1.msra.mxu0 0.0
        %601 = vmatprep.subr.mxu0 0.0
        %602 = vmatpush1.msra.mxu0 0.0
        %603 = vmatprep.subr.mxu0 0.0
        %604 = vmatpush1.msra.mxu0 0.0
        %605 = vmatprep.subr.mxu0 0.0
        %606 = vmatpush1.msra.mxu0 0.0
        %607 = vmatprep.subr.mxu0 0.0
        %608 = vmatpush1.msra.mxu0 0.0
        %609 = vmatprep.subr.mxu0 0.0
        %610 = vmatpush1.msra.mxu0 0.0
        %611 = vmatprep.subr.mxu0 0.0
        %612 = vmatpush1.msra.mxu0 0.0
        %613 = vmatprep.subr.mxu0 0.0
        %614 = vmatpush1.msra.mxu0 0.0
        %615 = vmatprep.subr.mxu0 0.0
        %616 = vmatpush1.msra.mxu0 0.0
        %617 = vmatprep.subr.mxu0 0.0
        %618 = vmatpush1.msra.mxu0 0.0
        %619 = vmatprep.subr.mxu0 0.0
        %620 = vmatpush1.msra.mxu0 0.0
        %621 = vmatprep.subr.mxu0 0.0
        %622 = vmatpush1.msra.mxu0 0.0
        %623 = vmatprep.subr.mxu0 0.0
        %624 = vmatpush1.msra.mxu0 0.0
        %625 = vmatprep.subr.mxu0 0.0
        %626 = vmatpush1.msra.mxu0 0.0
        %627 = vmatprep.mubr.f32.mxu0 0.0
        %628 = vmatmul.mubr.f32.gmra.mrb[0].mxu0 %v552
        %v629 = vpop.f32.mrb[0].mxu0
        %v630 = vadd.f32 %v533, %v629
        %v631 = vpop.f32.mrb[0].mxu0
        %632 = vmatprep.mubr.f32.mxu0 0.0
        %633 = vmatmul.mubr.f32.gmra.mrb[0].mxu0 %v555
        %v634 = vpop.f32.mrb[0].mxu0
        %v635 = vadd.f32 %v538, %v634
        %v636 = vpop.f32.mrb[0].mxu0
        %637 = vmatprep.mubr.f32.mxu0 0.0
        %638 = vmatmul.mubr.f32.gmra.mrb[0].mxu0 %v558
        %v639 = vpop.f32.mrb[0].mxu0
        %v640 = vadd.f32 %v543, %v639
        %v641 = vpop.f32.mrb[0].mxu0
        %642 = vmatprep.mubr.f32.mxu0 0.0
        %643 = vmatmul.mubr.f32.gmra.mrb[0].mxu0 %v561
        %v644 = vpop.f32.mrb[0].mxu0
        %v645 = vadd.f32 %v548, %v644
        %v646 = vpop.f32.mrb[0].mxu0
        %647 = vdwg.mxu0
        %v648 = vadd.f32 %v630, %v635
        %v649 = vadd.f32 %v648, %v640
        %v650 = vadd.f32 %v649, %v645
        %v651 = vrot.slane %v650, 4
        %v652 = vadd.f32 %v650, %v651
        %v653 = vrot.slane %v652, 2
        %v654 = vadd.f32 %v652, %v653
        %v655 = vrot.slane %v654, 1
        %v656 = vadd.f32 %v654, %v655
        %v657 = vmul.f32 %v656, 0.03125
        %v658 = vsub.f32 %v630, %v657
        %v659 = vsub.f32 %v635, %v657
        %v660 = vsub.f32 %v640, %v657
        %v661 = vsub.f32 %v645, %v657
        %v662 = vmul.f32 %v658, %v658
        %v663 = vmul.f32 %v659, %v659
        %v664 = vmul.f32 %v660, %v660
        %v665 = vmul.f32 %v661, %v661
        %v666 = vadd.f32 %v662, %v663
        %v667 = vadd.f32 %v666, %v664
        %v668 = vadd.f32 %v667, %v665
        %v669 = vrot.slane %v668, 4
        %v670 = vadd.f32 %v668, %v669
        %v671 = vrot.slane %v670, 2
        %v672 = vadd.f32 %v670, %v671
        %v673 = vrot.slane %v672, 1
        %v674 = vadd.f32 %v672, %v673
        %v675 = vmul.f32 %v674, 0.03125
        %v676 = vadd.f32 %v675, 1e-05
        %v677 = vrsqrt.pop %v676
        %v678 = vmul.f32 %v658, %v677
        %v679 = vmul.f32 %v659, %v677
        %v680 = vmul.f32 %v660, %v677
        %v681 = vmul.f32 %v661, %v677
        %v682 = vld [vmem:[%s3] sm:$0xff]
        %v683 = vld [vmem:[%s3 + $0x8] sm:$0xff]
        %v684 = vld [vmem:[%s3 + $0x10] sm:$0xff]
        %v685 = vld [vmem:[%s3 + $0x18] sm:$0xff]
        %687 = vset.pattern.permute.xlu0 0
        %688 = vperm.xlu0 %687, %v682
        %v689 = vpop.permute.xlu0 %688
        %692 = vset.pattern.permute.xlu0 0
        %693 = vperm.xlu0 %692, %v683
        %v694 = vpop.permute.xlu0 %693
        %697 = vset.pattern.permute.xlu0 0
        %698 = vperm.xlu0 %697, %v684
        %v699 = vpop.permute.xlu0 %698
        %702 = vset.pattern.permute.xlu0 0
        %703 = vperm.xlu0 %702, %v685
        %v704 = vpop.permute.xlu0 %703
        %v706 = vmul.f32 %v678, %v689
        %v707 = vmul.f32 %v679, %v694
        %v708 = vmul.f32 %v680, %v699
        %v709 = vmul.f32 %v681, %v704
        %v710 = vld [vmem:[%s4] sm:$0xff]
        %v711 = vld [vmem:[%s4 + $0x8] sm:$0xff]
        %v712 = vld [vmem:[%s4 + $0x10] sm:$0xff]
        %v713 = vld [vmem:[%s4 + $0x18] sm:$0xff]
        %715 = vset.pattern.permute.xlu0 0
        %716 = vperm.xlu0 %715, %v710
        %v717 = vpop.permute.xlu0 %716
        %720 = vset.pattern.permute.xlu0 0
        %721 = vperm.xlu0 %720, %v711
        %v722 = vpop.permute.xlu0 %721
        %725 = vset.pattern.permute.xlu0 0
        %726 = vperm.xlu0 %725, %v712
        %v727 = vpop.permute.xlu0 %726
        %730 = vset.pattern.permute.xlu0 0
        %731 = vperm.xlu0 %730, %v713
        %v732 = vpop.permute.xlu0 %731
        %v734 = vadd.f32 %v706, %v717
        %v735 = vadd.f32 %v707, %v722
        %v736 = vadd.f32 %v708, %v727
        %v737 = vadd.f32 %v709, %v732
        %v738 = vmax.f32 %v734, 0.0
        %v739 = vmax.f32 %v735, 0.0
        %v740 = vmax.f32 %v736, 0.0
        %v741 = vmax.f32 %v737, 0.0
        %v742 = vld [vmem:[%s5] sm:$0xff]
        %v743 = vld [vmem:[%s5 + $0x8] sm:$0xff]
        %v744 = vld [vmem:[%s6] sm:$0xff]
        %v745 = vld [vmem:[%s6 + $0x8] sm:$0xff]
        %747 = vset.pattern.permute.xlu0 0
        %748 = vperm.xlu0 %747, %v744
        %v749 = vpop.permute.xlu0 %748
        %752 = vset.pattern.permute.xlu0 0
        %753 = vperm.xlu0 %752, %v745
        %v754 = vpop.permute.xlu0 %753
        %v757 = vsel %vm550, %v742, 0
        %v760 = vsel %vm550, %v743, 0
        %762 = vmatprep.subr.mxu0 0.0
        %763 = vmatpush1.msra.mxu0 %v738
        %764 = vmatprep.subr.mxu0 0.0
        %765 = vmatpush1.msra.mxu0 %v739
        %766 = vmatprep.subr.mxu0 0.0
        %767 = vmatpush1.msra.mxu0 %v740
        %768 = vmatprep.subr.mxu0 0.0
        %769 = vmatpush1.msra.mxu0 %v741
        %770 = vmatprep.subr.mxu0 0.0
        %771 = vmatpush1.msra.mxu0 0.0
        %772 = vmatprep.subr.mxu0 0.0
        %773 = vmatpush1.msra.mxu0 0.0
        %774 = vmatprep.subr.mxu0 0.0
        %775 = vmatpush1.msra.mxu0 0.0
        %776 = vmatprep.subr.mxu0 0.0
        %777 = vmatpush1.msra.mxu0 0.0
        %778 = vmatprep.subr.mxu0 0.0
        %779 = vmatpush1.msra.mxu0 0.0
        %780 = vmatprep.subr.mxu0 0.0
        %781 = vmatpush1.msra.mxu0 0.0
        %782 = vmatprep.subr.mxu0 0.0
        %783 = vmatpush1.msra.mxu0 0.0
        %784 = vmatprep.subr.mxu0 0.0
        %785 = vmatpush1.msra.mxu0 0.0
        %786 = vmatprep.subr.mxu0 0.0
        %787 = vmatpush1.msra.mxu0 0.0
        %788 = vmatprep.subr.mxu0 0.0
        %789 = vmatpush1.msra.mxu0 0.0
        %790 = vmatprep.subr.mxu0 0.0
        %791 = vmatpush1.msra.mxu0 0.0
        %792 = vmatprep.subr.mxu0 0.0
        %793 = vmatpush1.msra.mxu0 0.0
        %794 = vmatprep.subr.mxu0 0.0
        %795 = vmatpush1.msra.mxu0 0.0
        %796 = vmatprep.subr.mxu0 0.0
        %797 = vmatpush1.msra.mxu0 0.0
        %798 = vmatprep.subr.mxu0 0.0
        %799 = vmatpush1.msra.mxu0 0.0
        %800 = vmatprep.subr.mxu0 0.0
        %801 = vmatpush1.msra.mxu0 0.0
        %802 = vmatprep.subr.mxu0 0.0
        %803 = vmatpush1.msra.mxu0 0.0
        %804 = vmatprep.subr.mxu0 0.0
        %805 = vmatpush1.msra.mxu0 0.0
        %806 = vmatprep.subr.mxu0 0.0
        %807 = vmatpush1.msra.mxu0 0.0
        %808 = vmatprep.subr.mxu0 0.0
        %809 = vmatpush1.msra.mxu0 0.0
        %810 = vmatprep.subr.mxu0 0.0
        %811 = vmatpush1.msra.mxu0 0.0
        %812 = vmatprep.subr.mxu0 0.0
        %813 = vmatpush1.msra.mxu0 0.0
        %814 = vmatprep.subr.mxu0 0.0
        %815 = vmatpush1.msra.mxu0 0.0
        %816 = vmatprep.subr.mxu0 0.0
        %817 = vmatpush1.msra.mxu0 0.0
        %818 = vmatprep.subr.mxu0 0.0
        %819 = vmatpush1.msra.mxu0 0.0
        %820 = vmatprep.subr.mxu0 0.0
        %821 = vmatpush1.msra.mxu0 0.0
        %822 = vmatprep.subr.mxu0 0.0
        %823 = vmatpush1.msra.mxu0 0.0
        %824 = vmatprep.subr.mxu0 0.0
        %825 = vmatpush1.msra.mxu0 0.0
        %826 = vmatprep.mubr.f32.mxu0 0.0
        %827 = vmatmul.mubr.f32.gmra.mrb[0].mxu0 %v757
        %v828 = vpop.f32.mrb[0].mxu0
        %v829 = vadd.f32 %v749, %v828
        %v830 = vpop.f32.mrb[0].mxu0
        %831 = vmatprep.mubr.f32.mxu0 0.0
        %832 = vmatmul.mubr.f32.gmra.mrb[0].mxu0 %v760
        %v833 = vpop.f32.mrb[0].mxu0
        %v834 = vadd.f32 %v754, %v833
        %v835 = vpop.f32.mrb[0].mxu0
        %836 = vdwg.mxu0
        %v837 = vadd.f32 %v829, %v834
        %v838 = vrot.slane %v837, 4
        %v839 = vadd.f32 %v837, %v838
        %v840 = vrot.slane %v839, 2
        %v841 = vadd.f32 %v839, %v840
        %v842 = vrot.slane %v841, 1
        %v843 = vadd.f32 %v841, %v842
        %v844 = vmul.f32 %v843, 0.0625
        %v845 = vsub.f32 %v829, %v844
        %v846 = vsub.f32 %v834, %v844
        %v847 = vmul.f32 %v845, %v845
        %v848 = vmul.f32 %v846, %v846
        %v849 = vadd.f32 %v847, %v848
        %v850 = vrot.slane %v849, 4
        %v851 = vadd.f32 %v849, %v850
        %v852 = vrot.slane %v851, 2
        %v853 = vadd.f32 %v851, %v852
        %v854 = vrot.slane %v853, 1
        %v855 = vadd.f32 %v853, %v854
        %v856 = vmul.f32 %v855, 0.0625
        %v857 = vadd.f32 %v856, 1e-05
        %v858 = vrsqrt.pop %v857
        %v859 = vmul.f32 %v845, %v858
        %v860 = vmul.f32 %v846, %v858
        %v861 = vld [vmem:[%s7] sm:$0xff]
        %v862 = vld [vmem:[%s7 + $0x8] sm:$0xff]
        %864 = vset.pattern.permute.xlu0 0
        %865 = vperm.xlu0 %864, %v861
        %v866 = vpop.permute.xlu0 %865
        %869 = vset.pattern.permute.xlu0 0
        %870 = vperm.xlu0 %869, %v862
        %v871 = vpop.permute.xlu0 %870
        %v873 = vmul.f32 %v859, %v866
        %v874 = vmul.f32 %v860, %v871
        %v875 = vld [vmem:[%s8] sm:$0xff]
        %v876 = vld [vmem:[%s8 + $0x8] sm:$0xff]
        %878 = vset.pattern.permute.xlu0 0
        %879 = vperm.xlu0 %878, %v875
        %v880 = vpop.permute.xlu0 %879
        %883 = vset.pattern.permute.xlu0 0
        %884 = vperm.xlu0 %883, %v876
        %v885 = vpop.permute.xlu0 %884
        %v887 = vadd.f32 %v873, %v880
        %v888 = vadd.f32 %v874, %v885
        %v889 = vmax.f32 %v887, 0.0
        %v890 = vmax.f32 %v888, 0.0
        %v891 = vld [vmem:[%s9] sm:$0xff]
        %v892 = vld [vmem:[%s9 + $0x8] sm:$0xff]
        %v893 = vld [vmem:[%s10] sm:$0xff]
        %v894 = vld [vmem:[%s10 + $0x8] sm:$0xff]
        %896 = vset.pattern.permute.xlu0 0
        %897 = vperm.xlu0 %896, %v893
        %v898 = vpop.permute.xlu0 %897
        %901 = vset.pattern.permute.xlu0 0
        %902 = vperm.xlu0 %901, %v894
        %v903 = vpop.permute.xlu0 %902
        %vm905 = vcmask 130048
        %v907 = vsel %vm905, %v891, 0
        %v910 = vsel %vm905, %v892, 0
        %912 = vmatprep.subr.mxu0 0.0
        %913 = vmatpush1.msra.mxu0 %v889
        %914 = vmatprep.subr.mxu0 0.0
        %915 = vmatpush1.msra.mxu0 %v890
        %916 = vmatprep.subr.mxu0 0.0
        %917 = vmatpush1.msra.mxu0 0.0
        %918 = vmatprep.subr.mxu0 0.0
        %919 = vmatpush1.msra.mxu0 0.0
        %920 = vmatprep.subr.mxu0 0.0
        %921 = vmatpush1.msra.mxu0 0.0
        %922 = vmatprep.subr.mxu0 0.0
        %923 = vmatpush1.msra.mxu0 0.0
        %924 = vmatprep.subr.mxu0 0.0
        %925 = vmatpush1.msra.mxu0 0.0
        %926 = vmatprep.subr.mxu0 0.0
        %927 = vmatpush1.msra.mxu0 0.0
        %928 = vmatprep.subr.mxu0 0.0
        %929 = vmatpush1.msra.mxu0 0.0
        %930 = vmatprep.subr.mxu0 0.0
        %931 = vmatpush1.msra.mxu0 0.0
        %932 = vmatprep.subr.mxu0 0.0
        %933 = vmatpush1.msra.mxu0 0.0
        %934 = vmatprep.subr.mxu0 0.0
        %935 = vmatpush1.msra.mxu0 0.0
        %936 = vmatprep.subr.mxu0 0.0
        %937 = vmatpush1.msra.mxu0 0.0
        %938 = vmatprep.subr.mxu0 0.0
        %939 = vmatpush1.msra.mxu0 0.0
        %940 = vmatprep.subr.mxu0 0.0
        %941 = vmatpush1.msra.mxu0 0.0
        %942 = vmatprep.subr.mxu0 0.0
        %943 = vmatpush1.msra.mxu0 0.0
        %944 = vmatprep.subr.mxu0 0.0
        %945 = vmatpush1.msra.mxu0 0.0
        %946 = vmatprep.subr.mxu0 0.0
        %947 = vmatpush1.msra.mxu0 0.0
        %948 = vmatprep.subr.mxu0 0.0
        %949 = vmatpush1.msra.mxu0 0.0
        %950 = vmatprep.subr.mxu0 0.0
        %951 = vmatpush1.msra.mxu0 0.0
        %952 = vmatprep.subr.mxu0 0.0
        %953 = vmatpush1.msra.mxu0 0.0
        %954 = vmatprep.subr.mxu0 0.0
        %955 = vmatpush1.msra.mxu0 0.0
        %956 = vmatprep.subr.mxu0 0.0
        %957 = vmatpush1.msra.mxu0 0.0
        %958 = vmatprep.subr.mxu0 0.0
        %959 = vmatpush1.msra.mxu0 0.0
        %960 = vmatprep.subr.mxu0 0.0
        %961 = vmatpush1.msra.mxu0 0.0
        %962 = vmatprep.subr.mxu0 0.0
        %963 = vmatpush1.msra.mxu0 0.0
        %964 = vmatprep.subr.mxu0 0.0
        %965 = vmatpush1.msra.mxu0 0.0
        %966 = vmatprep.subr.mxu0 0.0
        %967 = vmatpush1.msra.mxu0 0.0
        %968 = vmatprep.subr.mxu0 0.0
        %969 = vmatpush1.msra.mxu0 0.0
        %970 = vmatprep.subr.mxu0 0.0
        %971 = vmatpush1.msra.mxu0 0.0
        %972 = vmatprep.subr.mxu0 0.0
        %973 = vmatpush1.msra.mxu0 0.0
        %974 = vmatprep.subr.mxu0 0.0
        %975 = vmatpush1.msra.mxu0 0.0
        %976 = vmatprep.mubr.f32.mxu0 0.0
        %977 = vmatmul.mubr.f32.gmra.mrb[0].mxu0 %v907
        %v978 = vpop.f32.mrb[0].mxu0
        %v979 = vadd.f32 %v898, %v978
        %v980 = vpop.f32.mrb[0].mxu0
        %981 = vmatprep.mubr.f32.mxu0 0.0
        %982 = vmatmul.mubr.f32.gmra.mrb[0].mxu0 %v910
        %v983 = vpop.f32.mrb[0].mxu0
        %v984 = vadd.f32 %v903, %v983
        %v985 = vpop.f32.mrb[0].mxu0
        %986 = vdwg.mxu0
        %v987 = vadd.f32 %v979, %v984
        %v988 = vrot.slane %v987, 4
        %v989 = vadd.f32 %v987, %v988
        %v990 = vrot.slane %v989, 2
        %v991 = vadd.f32 %v989, %v990
        %v992 = vrot.slane %v991, 1
        %v993 = vadd.f32 %v991, %v992
        %v994 = vmul.f32 %v993, 0.0625
        %v995 = vsub.f32 %v979, %v994
        %v996 = vsub.f32 %v984, %v994
        %v997 = vmul.f32 %v995, %v995
        %v998 = vmul.f32 %v996, %v996
        %v999 = vadd.f32 %v997, %v998
        %v1000 = vrot.slane %v999, 4
        %v1001 = vadd.f32 %v999, %v1000
        %v1002 = vrot.slane %v1001, 2
        %v1003 = vadd.f32 %v1001, %v1002
        %v1004 = vrot.slane %v1003, 1
        %v1005 = vadd.f32 %v1003, %v1004
        %v1006 = vmul.f32 %v1005, 0.0625
        %v1007 = vadd.f32 %v1006, 1e-05
        %v1008 = vrsqrt.pop %v1007
        %v1009 = vmul.f32 %v995, %v1008
        %v1010 = vmul.f32 %v996, %v1008
        %v1011 = vld [vmem:[%s11] sm:$0xff]
        %v1012 = vld [vmem:[%s11 + $0x8] sm:$0xff]
        %1014 = vset.pattern.permute.xlu0 0
        %1015 = vperm.xlu0 %1014, %v1011
        %v1016 = vpop.permute.xlu0 %1015
        %1019 = vset.pattern.permute.xlu0 0
        %1020 = vperm.xlu0 %1019, %v1012
        %v1021 = vpop.permute.xlu0 %1020
        %v1023 = vmul.f32 %v1009, %v1016
        %v1024 = vmul.f32 %v1010, %v1021
        %v1025 = vld [vmem:[%s12] sm:$0xff]
        %v1026 = vld [vmem:[%s12 + $0x8] sm:$0xff]
        %1028 = vset.pattern.permute.xlu0 0
        %1029 = vperm.xlu0 %1028, %v1025
        %v1030 = vpop.permute.xlu0 %1029
        %1033 = vset.pattern.permute.xlu0 0
        %1034 = vperm.xlu0 %1033, %v1026
        %v1035 = vpop.permute.xlu0 %1034
        %v1037 = vadd.f32 %v1023, %v1030
        %v1038 = vadd.f32 %v1024, %v1035
        %v1039 = vmax.f32 %v1037, 0.0
        %v1040 = vmax.f32 %v1038, 0.0
        %v1041 = vld [vmem:[%s13] sm:$0xff]
        %v1042 = vld [vmem:[%s14] sm:$0xff]
        %1044 = vset.pattern.permute.xlu0 0
        %1045 = vperm.xlu0 %1044, %v1042
        %v1046 = vpop.permute.xlu0 %1045
        %v1049 = vsel %vm905, %v1041, 0
        %1051 = vmatprep.subr.mxu0 0.0
        %1052 = vmatpush1.msra.mxu0 %v1039
        %1053 = vmatprep.subr.mxu0 0.0
        %1054 = vmatpush1.msra.mxu0 %v1040
        %1055 = vmatprep.subr.mxu0 0.0
        %1056 = vmatpush1.msra.mxu0 0.0
        %1057 = vmatprep.subr.mxu0 0.0
        %1058 = vmatpush1.msra.mxu0 0.0
        %1059 = vmatprep.subr.mxu0 0.0
        %1060 = vmatpush1.msra.mxu0 0.0
        %1061 = vmatprep.subr.mxu0 0.0
        %1062 = vmatpush1.msra.mxu0 0.0
        %1063 = vmatprep.subr.mxu0 0.0
        %1064 = vmatpush1.msra.mxu0 0.0
        %1065 = vmatprep.subr.mxu0 0.0
        %1066 = vmatpush1.msra.mxu0 0.0
        %1067 = vmatprep.subr.mxu0 0.0
        %1068 = vmatpush1.msra.mxu0 0.0
        %1069 = vmatprep.subr.mxu0 0.0
        %1070 = vmatpush1.msra.mxu0 0.0
        %1071 = vmatprep.subr.mxu0 0.0
        %1072 = vmatpush1.msra.mxu0 0.0
        %1073 = vmatprep.subr.mxu0 0.0
        %1074 = vmatpush1.msra.mxu0 0.0
        %1075 = vmatprep.subr.mxu0 0.0
        %1076 = vmatpush1.msra.mxu0 0.0
        %1077 = vmatprep.subr.mxu0 0.0
        %1078 = vmatpush1.msra.mxu0 0.0
        %1079 = vmatprep.subr.mxu0 0.0
        %1080 = vmatpush1.msra.mxu0 0.0
        %1081 = vmatprep.subr.mxu0 0.0
        %1082 = vmatpush1.msra.mxu0 0.0
        %1083 = vmatprep.subr.mxu0 0.0
        %1084 = vmatpush1.msra.mxu0 0.0
        %1085 = vmatprep.subr.mxu0 0.0
        %1086 = vmatpush1.msra.mxu0 0.0
        %1087 = vmatprep.subr.mxu0 0.0
        %1088 = vmatpush1.msra.mxu0 0.0
        %1089 = vmatprep.subr.mxu0 0.0
        %1090 = vmatpush1.msra.mxu0 0.0
        %1091 = vmatprep.subr.mxu0 0.0
        %1092 = vmatpush1.msra.mxu0 0.0
        %1093 = vmatprep.subr.mxu0 0.0
        %1094 = vmatpush1.msra.mxu0 0.0
        %1095 = vmatprep.subr.mxu0 0.0
        %1096 = vmatpush1.msra.mxu0 0.0
        %1097 = vmatprep.subr.mxu0 0.0
        %1098 = vmatpush1.msra.mxu0 0.0
        %1099 = vmatprep.subr.mxu0 0.0
        %1100 = vmatpush1.msra.mxu0 0.0
        %1101 = vmatprep.subr.mxu0 0.0
        %1102 = vmatpush1.msra.mxu0 0.0
        %1103 = vmatprep.subr.mxu0 0.0
        %1104 = vmatpush1.msra.mxu0 0.0
        %1105 = vmatprep.subr.mxu0 0.0
        %1106 = vmatpush1.msra.mxu0 0.0
        %1107 = vmatprep.subr.mxu0 0.0
        %1108 = vmatpush1.msra.mxu0 0.0
        %1109 = vmatprep.subr.mxu0 0.0
        %1110 = vmatpush1.msra.mxu0 0.0
        %1111 = vmatprep.subr.mxu0 0.0
        %1112 = vmatpush1.msra.mxu0 0.0
        %1113 = vmatprep.subr.mxu0 0.0
        %1114 = vmatpush1.msra.mxu0 0.0
        %1115 = vmatprep.mubr.f32.mxu0 0.0
        %1116 = vmatmul.mubr.f32.gmra.mrb[0].mxu0 %v1049
        %v1117 = vpop.f32.mrb[0].mxu0
        %v1118 = vadd.f32 %v1046, %v1117
        %v1119 = vpop.f32.mrb[0].mxu0
        %1120 = vdwg.mxu0
        %1121 = vst [vmem:[%s509] sm:$0xff] %v1118
        %s1122 = sand.u32 %s373, 1
        %s1123 = scalar_lea.sflag [#allocation3], %s1122
        %s1124 = sand.u32 %s373, 1
        %s1125 = smul.addr %s1124, 8
        %s1126 = scalar_lea.vmem [#allocation2], %s1125
        // Predicated region
        $region81: #{tpu_custom_call.1} parent=79 // pred_check
          %p1127 = pneg %p383
        $region82: #{tpu_custom_call.1} parent=79 // pred_check_branch
          %1129 = sbr.rel (%p1127) target = $region84
        $region83: #{tpu_custom_call.1} parent=79 // pred_region
          %s1131 = ssub.s32 128, 128
          %1132 = vsyncadd %s1123, %s1131
          %s1133 = sadd.s32 %s34, %s33
          %s1134 = smul.addr %s1133, 128
          %s1135 = scalar_lea.hbm %s15, %s1134
          %s1137 = sshll.u32 %s1126, 4
          %s1138 = int_to_ptr.vmem [resolvable:$true] %s1137
          %1140 = dma.vmem_to_hbm [thread:$0]  %s1138, 128, %s1135, %s1123
        $region84: #{tpu_custom_call.1} parent=79 // pred_fallthru
          _
      $region80: #{tpu_custom_call.1} parent=5 // pred_fallthru
        _
      %p1141 = scmp.le.s32.totalorder 2, %s24
      // Predicated region
      $region85: #{tpu_custom_call.1} parent=5 // pred_check
        %p1142 = pneg %p1141
      $region86: #{tpu_custom_call.1} parent=5 // pred_check_branch
        %1144 = sbr.rel (%p1142) target = $region88
      $region87: #{tpu_custom_call.1} parent=5 // pred_region
        %s1145 = ssub.s32 %s24, 2
        // Predicated region
        $region89: #{tpu_custom_call.1} parent=87 // pred_check
          %p1146 = pneg %p389
        $region90: #{tpu_custom_call.1} parent=87 // pred_check_branch
          %1148 = sbr.rel (%p1146) target = $region92
        $region91: #{tpu_custom_call.1} parent=87 // pred_region
          %s1149 = sand.u32 %s374, 1
          %s1150 = scalar_lea.sflag [#allocation3], %s1149
          %s1151 = sand.u32 %s374, 1
          %s1152 = smul.addr %s1151, 8
          %s1153 = scalar_lea.vmem [#allocation2], %s1152
          %1154 = dma.done %s1150, 128
        $region92: #{tpu_custom_call.1} parent=87 // pred_fallthru
          _
      $region88: #{tpu_custom_call.1} parent=5 // pred_fallthru
        _
    $region6: #{tpu_custom_call.1} parent=1 // loop_footer
      %s28 = sadd.s32 1, %s24
    $region7: #{tpu_custom_call.1} parent=1 // loop_footer_branch
      %23 = sbr.rel target = $region3
    $region8: #{tpu_custom_call.1} parent=1 // loop_exit
      _
    %1155 = vsyncpa [#allocation3], 1
    %s1156 = scalar_lea.sflag [#allocation3], 1
    %1157 = vsyncpa %s1156, 1

// kernel: tpu_custom_call.1
$region0: #{tpu_custom_call.1}
  #allocation0 [shape = 'u32[]', space=smem, size = 0x4, offset = 0x4, fixed_abs, tag = 'smem constant byte address 0x4 - core index']
  #allocation1 [shape = 'u32[144,128]{1,0:T(1,128)}', space=vmem, size = 0x12000, scoped, tag = 'internal scratch']
  %s0 = inlined_call_operand.vmem [shape: f32[2,32,128], index: 0, kind: input, shape index: {}]
  %s1 = inlined_call_operand.vmem [shape: f32[32,32], index: 1, kind: input, shape index: {}]
  %s2 = inlined_call_operand.vmem [shape: f32[32,1], index: 2, kind: input, shape index: {}]
  %s3 = inlined_call_operand.vmem [shape: f32[32,1], index: 3, kind: input, shape index: {}]
  %s4 = inlined_call_operand.vmem [shape: f32[32,1], index: 4, kind: input, shape index: {}]
  %s5 = inlined_call_operand.vmem [shape: f32[16,32], index: 5, kind: input, shape index: {}]
  %s6 = inlined_call_operand.vmem [shape: f32[16,1], index: 6, kind: input, shape index: {}]
  %s7 = inlined_call_operand.vmem [shape: f32[16,1], index: 7, kind: input, shape index: {}]
  %s8 = inlined_call_operand.vmem [shape: f32[16,1], index: 8, kind: input, shape index: {}]
  %s9 = inlined_call_operand.vmem [shape: f32[16,16], index: 9, kind: input, shape index: {}]
  %s10 = inlined_call_operand.vmem [shape: f32[16,1], index: 10, kind: input, shape index: {}]
  %s11 = inlined_call_operand.vmem [shape: f32[16,1], index: 11, kind: input, shape index: {}]
  %s12 = inlined_call_operand.vmem [shape: f32[16,1], index: 12, kind: input, shape index: {}]
  %s13 = inlined_call_operand.vmem [shape: f32[8,16], index: 13, kind: input, shape index: {}]
  %s14 = inlined_call_operand.vmem [shape: f32[8,1], index: 14, kind: input, shape index: {}]
  %s15 = inlined_call_operand.hbm [shape: f32[2,8,128], index: 15, kind: output, shape index: {}]
  %s16 = sld [smem:[#allocation0]]
  $region93: #{tpu_custom_call.1} parent=0
    _
  %s18 = ssub.s32 1, %s16
  %s19 = scalar_select 0, %s18, %s16
  $region1: #{tpu_custom_call.1} parent=0
    #allocation2 [shape = 'u8[8192]{0}', space=vmem, size = 0x2000, scoped, tag = 'output window, operand 0']
    #allocation3 [shape = 's32[2]{0}', space=sflag, size = 0x8, scoped, tag = 'scoped memory for tpu_custom_call.1']
    %20 = vsyncpa [#allocation3], 0
    %s21 = scalar_lea.sflag [#allocation3], 1
    %22 = vsyncpa %s21, 0
    loop: start=0, step=1, limit=4
    $region2: #{tpu_custom_call.1} parent=1 // loop_pre_header
      _
    $region3: #{tpu_custom_call.1} parent=1 // loop_header
      %s24 = sphi 0, %s28
      %p25 = scmp.ge.s32.totalorder %s24, 4
      %s31 = sphi 0, %s43
      %s32 = sphi 0, %s39
      %s33 = sphi 0, %s31
      %s34 = sphi 0, %s32
      %s35 = sphi 0, %s33
      %s36 = sphi 0, %s34
      %s48 = sphi 0, %s50
      %s51 = sphi 0, %s48
      %s52 = sphi 0, %s51
      %s68 = sphi 0, %s52
      %s72 = sphi 0, %s72
      %s74 = sphi 0, %s72
      %s75 = sphi 0, %s74
      %s89 = sphi 0, %s75
      %s93 = sphi 0, %s93
      %s95 = sphi 0, %s93
      %s96 = sphi 0, %s95
      %s110 = sphi 0, %s96
      %s114 = sphi 0, %s114
      %s116 = sphi 0, %s114
      %s117 = sphi 0, %s116
      %s131 = sphi 0, %s117
      %s135 = sphi 0, %s135
      %s137 = sphi 0, %s135
      %s138 = sphi 0, %s137
      %s152 = sphi 0, %s138
      %s156 = sphi 0, %s156
      %s158 = sphi 0, %s156
      %s159 = sphi 0, %s158
      %s173 = sphi 0, %s159
      %s177 = sphi 0, %s177
      %s179 = sphi 0, %s177
      %s180 = sphi 0, %s179
      %s194 = sphi 0, %s180
      %s198 = sphi 0, %s198
      %s200 = sphi 0, %s198
      %s201 = sphi 0, %s200
      %s215 = sphi 0, %s201
      %s219 = sphi 0, %s219
      %s221 = sphi 0, %s219
      %s222 = sphi 0, %s221
      %s236 = sphi 0, %s222
      %s240 = sphi 0, %s240
      %s242 = sphi 0, %s240
      %s243 = sphi 0, %s242
      %s257 = sphi 0, %s243
      %s261 = sphi 0, %s261
      %s263 = sphi 0, %s261
      %s264 = sphi 0, %s263
      %s278 = sphi 0, %s264
      %s282 = sphi 0, %s282
      %s284 = sphi 0, %s282
      %s285 = sphi 0, %s284
      %s299 = sphi 0, %s285
      %s303 = sphi 0, %s303
      %s305 = sphi 0, %s303
      %s306 = sphi 0, %s305
      %s320 = sphi 0, %s306
      %s324 = sphi 0, %s324
      %s326 = sphi 0, %s324
      %s327 = sphi 0, %s326
      %s341 = sphi 0, %s327
      %s345 = sphi 0, %s345
      %s347 = sphi 0, %s345
      %s348 = sphi 0, %s347
      %s362 = sphi 0, %s348
      %s370 = sphi 0, %s372
      %s373 = sphi 0, %s370
      %s374 = sphi 0, %s373
      %s390 = sphi 0, %s374
    $region4: #{tpu_custom_call.1} parent=1 // loop_header_branch
      %27 = sbr.rel (%p25) target = $region8
    $region5: #{tpu_custom_call.1} parent=1 // loop_body
      %s29 = ssub.s32 %s24, 1
      %s30 = ssub.s32 %s24, 2
      %s37 = sadd.s32 1, %s32
      %p38 = scmp.ge.s32.totalorder %s37, 1
      %s39 = scalar_select %p38, 0, %s37
      %s40 = sadd.s32 1, %s31
      %s41 = scalar_select %p38, %s40, %s31
      %p42 = scmp.ge.s32.totalorder %s41, 2
      %s43 = scalar_select %p42, 0, %s41
      %s44 = ssub.s32 %s31, %s43
      %s45 = ssub.s32 %s32, %s39
      %s46 = sor.u32 %s44, %s45
      %p47 = scmp.eq.s32.totalorder %s46, 0
      %s49 = sadd.s32 %s48, 1
      %s50 = scalar_select %p47, %s48, %s49
      %p53 = pneg %p47
      %p54 = scmp.eq.s32.totalorder %s24, 1
      %p55 = por %p53, %p54
      %p56 = scmp.ne.s32.totalorder %s48, %s51
      %p57 = scmp.eq.s32.totalorder %s24, 0
      %p58 = por %p56, %p57
      %p59 = scmp.ne.s32.totalorder %s48, %s51
      %p60 = scmp.eq.s32.totalorder %s29, 1
      %p61 = por %p59, %p60
      %p62 = scmp.ne.s32.totalorder %s51, %s52
      %p63 = scmp.eq.s32.totalorder %s29, 0
      %p64 = por %p62, %p63
      %p65 = scmp.ne.s32.totalorder %s51, %s52
      %p66 = scmp.eq.s32.totalorder %s30, 1
      %p67 = por %p65, %p66
      %p69 = scmp.ne.s32.totalorder %s52, %s68
      %p70 = scmp.eq.s32.totalorder %s30, 0
      %p71 = por %p69, %p70
      %s73 = sadd.s32 %s72, 1
      %p76 = scmp.eq.s32.totalorder %s24, 1
      %p77 = scmp.ne.s32.totalorder %s72, %s74
      %p78 = scmp.eq.s32.totalorder %s24, 0
      %p79 = por %p77, %p78
      %p80 = scmp.ne.s32.totalorder %s72, %s74
      %p81 = scmp.eq.s32.totalorder %s29, 1
      %p82 = por %p80, %p81
      %p83 = scmp.ne.s32.totalorder %s74, %s75
      %p84 = scmp.eq.s32.totalorder %s29, 0
      %p85 = por %p83, %p84
      %p86 = scmp.ne.s32.totalorder %s74, %s75
      %p87 = scmp.eq.s32.totalorder %s30, 1
      %p88 = por %p86, %p87
      %p90 = scmp.ne.s32.totalorder %s75, %s89
      %p91 = scmp.eq.s32.totalorder %s30, 0
      %p92 = por %p90, %p91
      %s94 = sadd.s32 %s93, 1
      %p97 = scmp.eq.s32.totalorder %s24, 1
      %p98 = scmp.ne.s32.totalorder %s93, %s95
      %p99 = scmp.eq.s32.totalorder %s24, 0
      %p100 = por %p98, %p99
      %p101 = scmp.ne.s32.totalorder %s93, %s95
      %p102 = scmp.eq.s32.totalorder %s29, 1
      %p103 = por %p101, %p102
      %p104 = scmp.ne.s32.totalorder %s95, %s96
      %p105 = scmp.eq.s32.totalorder %s29, 0
      %p106 = por %p104, %p105
      %p107 = scmp.ne.s32.totalorder %s95, %s96
      %p108 = scmp.eq.s32.totalorder %s30, 1
      %p109 = por %p107, %p108
      %p111 = scmp.ne.s32.totalorder %s96, %s110
      %p112 = scmp.eq.s32.totalorder %s30, 0
      %p113 = por %p111, %p112
      %s115 = sadd.s32 %s114, 1
      %p118 = scmp.eq.s32.totalorder %s24, 1
      %p119 = scmp.ne.s32.totalorder %s114, %s116
      %p120 = scmp.eq.s32.totalorder %s24, 0
      %p121 = por %p119, %p120
      %p122 = scmp.ne.s32.totalorder %s114, %s116
      %p123 = scmp.eq.s32.totalorder %s29, 1
      %p124 = por %p122, %p123
      %p125 = scmp.ne.s32.totalorder %s116, %s117
      %p126 = scmp.eq.s32.totalorder %s29, 0
      %p127 = por %p125, %p126
      %p128 = scmp.ne.s32.totalorder %s116, %s117
      %p129 = scmp.eq.s32.totalorder %s30, 1
      %p130 = por %p128, %p129
      %p132 = scmp.ne.s32.totalorder %s117, %s131
      %p133 = scmp.eq.s32.totalorder %s30, 0
      %p134 = por %p132, %p133
      %s136 = sadd.s32 %s135, 1
      %p139 = scmp.eq.s32.totalorder %s24, 1
      %p140 = scmp.ne.s32.totalorder %s135, %s137
      %p141 = scmp.eq.s32.totalorder %s24, 0
      %p142 = por %p140, %p141
      %p143 = scmp.ne.s32.totalorder %s135, %s137
      %p144 = scmp.eq.s32.totalorder %s29, 1
      %p145 = por %p143, %p144
      %p146 = scmp.ne.s32.totalorder %s137, %s138
      %p147 = scmp.eq.s32.totalorder %s29, 0
      %p148 = por %p146, %p147
      %p149 = scmp.ne.s32.totalorder %s137, %s138
      %p150 = scmp.eq.s32.totalorder %s30, 1
      %p151 = por %p149, %p150
      %p153 = scmp.ne.s32.totalorder %s138, %s152
      %p154 = scmp.eq.s32.totalorder %s30, 0
      %p155 = por %p153, %p154
      %s157 = sadd.s32 %s156, 1
      %p160 = scmp.eq.s32.totalorder %s24, 1
      %p161 = scmp.ne.s32.totalorder %s156, %s158
      %p162 = scmp.eq.s32.totalorder %s24, 0
      %p163 = por %p161, %p162
      %p164 = scmp.ne.s32.totalorder %s156, %s158
      %p165 = scmp.eq.s32.totalorder %s29, 1
      %p166 = por %p164, %p165
      %p167 = scmp.ne.s32.totalorder %s158, %s159
      %p168 = scmp.eq.s32.totalorder %s29, 0
      %p169 = por %p167, %p168
      %p170 = scmp.ne.s32.totalorder %s158, %s159
      %p171 = scmp.eq.s32.totalorder %s30, 1
      %p172 = por %p170, %p171
      %p174 = scmp.ne.s32.totalorder %s159, %s173
      %p175 = scmp.eq.s32.totalorder %s30, 0
      %p176 = por %p174, %p175
      %s178 = sadd.s32 %s177, 1
      %p181 = scmp.eq.s32.totalorder %s24, 1
      %p182 = scmp.ne.s32.totalorder %s177, %s179
      %p183 = scmp.eq.s32.totalorder %s24, 0
      %p184 = por %p182, %p183
      %p185 = scmp.ne.s32.totalorder %s177, %s179
      %p186 = scmp.eq.s32.totalorder %s29, 1
      %p187 = por %p185, %p186
      %p188 = scmp.ne.s32.totalorder %s179, %s180
      %p189 = scmp.eq.s32.totalorder %s29, 0
      %p190 = por %p188, %p189
      %p191 = scmp.ne.s32.totalorder %s179, %s180
      %p192 = scmp.eq.s32.totalorder %s30, 1
      %p193 = por %p191, %p192
      %p195 = scmp.ne.s32.totalorder %s180, %s194
      %p196 = scmp.eq.s32.totalorder %s30, 0
      %p197 = por %p195, %p196
      %s199 = sadd.s32 %s198, 1
      %p202 = scmp.eq.s32.totalorder %s24, 1
      %p203 = scmp.ne.s32.totalorder %s198, %s200
      %p204 = scmp.eq.s32.totalorder %s24, 0
      %p205 = por %p203, %p204
      %p206 = scmp.ne.s32.totalorder %s198, %s200
      %p207 = scmp.eq.s32.totalorder %s29, 1
      %p208 = por %p206, %p207
      %p209 = scmp.ne.s32.totalorder %s200, %s201
      %p210 = scmp.eq.s32.totalorder %s29, 0
      %p211 = por %p209, %p210
      %p212 = scmp.ne.s32.totalorder %s200, %s201
      %p213 = scmp.eq.s32.totalorder %s30, 1
      %p214 = por %p212, %p213
      %p216 = scmp.ne.s32.totalorder %s201, %s215
      %p217 = scmp.eq.s32.totalorder %s30, 0
      %p218 = por %p216, %p217
      %s220 = sadd.s32 %s219, 1
      %p223 = scmp.eq.s32.totalorder %s24, 1
      %p224 = scmp.ne.s32.totalorder %s219, %s221
      %p225 = scmp.eq.s32.totalorder %s24, 0
      %p226 = por %p224, %p225
      %p227 = scmp.ne.s32.totalorder %s219, %s221
      %p228 = scmp.eq.s32.totalorder %s29, 1
      %p229 = por %p227, %p228
      %p230 = scmp.ne.s32.totalorder %s221, %s222
      %p231 = scmp.eq.s32.totalorder %s29, 0
      %p232 = por %p230, %p231
      %p233 = scmp.ne.s32.totalorder %s221, %s222
      %p234 = scmp.eq.s32.totalorder %s30, 1
      %p235 = por %p233, %p234
      %p237 = scmp.ne.s32.totalorder %s222, %s236
      %p238 = scmp.eq.s32.totalorder %s30, 0
      %p239 = por %p237, %p238
      %s241 = sadd.s32 %s240, 1
      %p244 = scmp.eq.s32.totalorder %s24, 1
      %p245 = scmp.ne.s32.totalorder %s240, %s242
      %p246 = scmp.eq.s32.totalorder %s24, 0
      %p247 = por %p245, %p246
      %p248 = scmp.ne.s32.totalorder %s240, %s242
      %p249 = scmp.eq.s32.totalorder %s29, 1
      %p250 = por %p248, %p249
      %p251 = scmp.ne.s32.totalorder %s242, %s243
      %p252 = scmp.eq.s32.totalorder %s29, 0
      %p253 = por %p251, %p252
      %p254 = scmp.ne.s32.totalorder %s242, %s243
      %p255 = scmp.eq.s32.totalorder %s30, 1
      %p256 = por %p254, %p255
      %p258 = scmp.ne.s32.totalorder %s243, %s257
      %p259 = scmp.eq.s32.totalorder %s30, 0
      %p260 = por %p258, %p259
      %s262 = sadd.s32 %s261, 1
      %p265 = scmp.eq.s32.totalorder %s24, 1
      %p266 = scmp.ne.s32.totalorder %s261, %s263
      %p267 = scmp.eq.s32.totalorder %s24, 0
      %p268 = por %p266, %p267
      %p269 = scmp.ne.s32.totalorder %s261, %s263
      %p270 = scmp.eq.s32.totalorder %s29, 1
      %p271 = por %p269, %p270
      %p272 = scmp.ne.s32.totalorder %s263, %s264
      %p273 = scmp.eq.s32.totalorder %s29, 0
      %p274 = por %p272, %p273
      %p275 = scmp.ne.s32.totalorder %s263, %s264
      %p276 = scmp.eq.s32.totalorder %s30, 1
      %p277 = por %p275, %p276
      %p279 = scmp.ne.s32.totalorder %s264, %s278
      %p280 = scmp.eq.s32.totalorder %s30, 0
      %p281 = por %p279, %p280
      %s283 = sadd.s32 %s282, 1
      %p286 = scmp.eq.s32.totalorder %s24, 1
      %p287 = scmp.ne.s32.totalorder %s282, %s284
      %p288 = scmp.eq.s32.totalorder %s24, 0
      %p289 = por %p287, %p288
      %p290 = scmp.ne.s32.totalorder %s282, %s284
      %p291 = scmp.eq.s32.totalorder %s29, 1
      %p292 = por %p290, %p291
      %p293 = scmp.ne.s32.totalorder %s284, %s285
      %p294 = scmp.eq.s32.totalorder %s29, 0
      %p295 = por %p293, %p294
      %p296 = scmp.ne.s32.totalorder %s284, %s285
      %p297 = scmp.eq.s32.totalorder %s30, 1
      %p298 = por %p296, %p297
      %p300 = scmp.ne.s32.totalorder %s285, %s299
      %p301 = scmp.eq.s32.totalorder %s30, 0
      %p302 = por %p300, %p301
      %s304 = sadd.s32 %s303, 1
      %p307 = scmp.eq.s32.totalorder %s24, 1
      %p308 = scmp.ne.s32.totalorder %s303, %s305
      %p309 = scmp.eq.s32.totalorder %s24, 0
      %p310 = por %p308, %p309
      %p311 = scmp.ne.s32.totalorder %s303, %s305
      %p312 = scmp.eq.s32.totalorder %s29, 1
      %p313 = por %p311, %p312
      %p314 = scmp.ne.s32.totalorder %s305, %s306
      %p315 = scmp.eq.s32.totalorder %s29, 0
      %p316 = por %p314, %p315
      %p317 = scmp.ne.s32.totalorder %s305, %s306
      %p318 = scmp.eq.s32.totalorder %s30, 1
      %p319 = por %p317, %p318
      %p321 = scmp.ne.s32.totalorder %s306, %s320
      %p322 = scmp.eq.s32.totalorder %s30, 0
      %p323 = por %p321, %p322
      %s325 = sadd.s32 %s324, 1
      %p328 = scmp.eq.s32.totalorder %s24, 1
      %p329 = scmp.ne.s32.totalorder %s324, %s326
      %p330 = scmp.eq.s32.totalorder %s24, 0
      %p331 = por %p329, %p330
      %p332 = scmp.ne.s32.totalorder %s324, %s326
      %p333 = scmp.eq.s32.totalorder %s29, 1
      %p334 = por %p332, %p333
      %p335 = scmp.ne.s32.totalorder %s326, %s327
      %p336 = scmp.eq.s32.totalorder %s29, 0
      %p337 = por %p335, %p336
      %p338 = scmp.ne.s32.totalorder %s326, %s327
      %p339 = scmp.eq.s32.totalorder %s30, 1
      %p340 = por %p338, %p339
      %p342 = scmp.ne.s32.totalorder %s327, %s341
      %p343 = scmp.eq.s32.totalorder %s30, 0
      %p344 = por %p342, %p343
      %s346 = sadd.s32 %s345, 1
      %p349 = scmp.eq.s32.totalorder %s24, 1
      %p350 = scmp.ne.s32.totalorder %s345, %s347
      %p351 = scmp.eq.s32.totalorder %s24, 0
      %p352 = por %p350, %p351
      %p353 = scmp.ne.s32.totalorder %s345, %s347
      %p354 = scmp.eq.s32.totalorder %s29, 1
      %p355 = por %p353, %p354
      %p356 = scmp.ne.s32.totalorder %s347, %s348
      %p357 = scmp.eq.s32.totalorder %s29, 0
      %p358 = por %p356, %p357
      %p359 = scmp.ne.s32.totalorder %s347, %s348
      %p360 = scmp.eq.s32.totalorder %s30, 1
      %p361 = por %p359, %p360
      %p363 = scmp.ne.s32.totalorder %s348, %s362
      %p364 = scmp.eq.s32.totalorder %s30, 0
      %p365 = por %p363, %p364
      %s366 = ssub.s32 %s31, %s43
      %s367 = ssub.s32 %s32, %s39
      %s368 = sor.u32 %s366, %s367
      %p369 = scmp.eq.s32.totalorder %s368, 0
      %s371 = sadd.s32 %s370, 1
      %s372 = scalar_select %p369, %s370, %s371
      %p375 = pneg %p369
      %p376 = scmp.eq.s32.totalorder %s24, 1
      %p377 = por %p375, %p376
      %p378 = scmp.ne.s32.totalorder %s370, %s373
      %p379 = scmp.eq.s32.totalorder %s24, 0
      %p380 = por %p378, %p379
      %p381 = scmp.ne.s32.totalorder %s370, %s373
      %p382 = scmp.eq.s32.totalorder %s29, 1
      %p383 = por %p381, %p382
      %p384 = scmp.ne.s32.totalorder %s373, %s374
      %p385 = scmp.eq.s32.totalorder %s29, 0
      %p386 = por %p384, %p385
      %p387 = scmp.ne.s32.totalorder %s373, %s374
      %p388 = scmp.eq.s32.totalorder %s30, 1
      %p389 = por %p387, %p388
      %p391 = scmp.ne.s32.totalorder %s374, %s390
      %p392 = scmp.eq.s32.totalorder %s30, 0
      %p393 = por %p391, %p392
      %p394 = scmp.le.s32.totalorder 1, %s24
      %p395 = scmp.lt.s32.totalorder %s24, 3
      %p396 = pnand %p394, %p395
      %p397 = pneg %p396
      // Predicated region
      $region9: #{tpu_custom_call.1} parent=5 // pred_check
        _
      $region10: #{tpu_custom_call.1} parent=5 // pred_check_branch
        %399 = sbr.rel (%p396) target = $region12
      $region11: #{tpu_custom_call.1} parent=5 // pred_region
        %s400 = ssub.s32 %s24, 1
        // Predicated region
        $region13: #{tpu_custom_call.1} parent=11 // pred_check
          %p401 = pneg %p85
        $region14: #{tpu_custom_call.1} parent=11 // pred_check_branch
          %403 = sbr.rel (%p401) target = $region16
        $region15: #{tpu_custom_call.1} parent=11 // pred_region
          _
        $region16: #{tpu_custom_call.1} parent=11 // pred_fallthru
          _
        // Predicated region
        $region17: #{tpu_custom_call.1} parent=11 // pred_check
          %p404 = pneg %p106
        $region18: #{tpu_custom_call.1} parent=11 // pred_check_branch
          %406 = sbr.rel (%p404) target = $region20
        $region19: #{tpu_custom_call.1} parent=11 // pred_region
          _
        $region20: #{tpu_custom_call.1} parent=11 // pred_fallthru
          _
        // Predicated region
        $region21: #{tpu_custom_call.1} parent=11 // pred_check
          %p407 = pneg %p127
        $region22: #{tpu_custom_call.1} parent=11 // pred_check_branch
          %409 = sbr.rel (%p407) target = $region24
        $region23: #{tpu_custom_call.1} parent=11 // pred_region
          _
        $region24: #{tpu_custom_call.1} parent=11 // pred_fallthru
          _
        // Predicated region
        $region25: #{tpu_custom_call.1} parent=11 // pred_check
          %p410 = pneg %p148
        $region26: #{tpu_custom_call.1} parent=11 // pred_check_branch
          %412 = sbr.rel (%p410) target = $region28
        $region27: #{tpu_custom_call.1} parent=11 // pred_region
          _
        $region28: #{tpu_custom_call.1} parent=11 // pred_fallthru
          _
        // Predicated region
        $region29: #{tpu_custom_call.1} parent=11 // pred_check
          %p413 = pneg %p169
        $region30: #{tpu_custom_call.1} parent=11 // pred_check_branch
          %415 = sbr.rel (%p413) target = $region32
        $region31: #{tpu_custom_call.1} parent=11 // pred_region
          _
        $region32: #{tpu_custom_call.1} parent=11 // pred_fallthru
          _
        // Predicated region
        $region33: #{tpu_custom_call.1} parent=11 // pred_check
          %p416 = pneg %p190
        $region34: #{tpu_custom_call.1} parent=11 // pred_check_branch
          %418 = sbr.rel (%p416) target = $region36
        $region35: #{tpu_custom_call.1} parent=11 // pred_region
          _
        $region36: #{tpu_custom_call.1} parent=11 // pred_fallthru
          _
        // Predicated region
        $region37: #{tpu_custom_call.1} parent=11 // pred_check
          %p419 = pneg %p211
        $region38: #{tpu_custom_call.1} parent=11 // pred_check_branch
          %421 = sbr.rel (%p419) target = $region40
        $region39: #{tpu_custom_call.1} parent=11 // pred_region
          _
        $region40: #{tpu_custom_call.1} parent=11 // pred_fallthru
          _
        // Predicated region
        $region41: #{tpu_custom_call.1} parent=11 // pred_check
          %p422 = pneg %p232
        $region42: #{tpu_custom_call.1} parent=11 // pred_check_branch
          %424 = sbr.rel (%p422) target = $region44
        $region43: #{tpu_custom_call.1} parent=11 // pred_region
          _
        $region44: #{tpu_custom_call.1} parent=11 // pred_fallthru
          _
        // Predicated region
        $region45: #{tpu_custom_call.1} parent=11 // pred_check
          %p425 = pneg %p253
        $region46: #{tpu_custom_call.1} parent=11 // pred_check_branch
          %427 = sbr.rel (%p425) target = $region48
        $region47: #{tpu_custom_call.1} parent=11 // pred_region
          _
        $region48: #{tpu_custom_call.1} parent=11 // pred_fallthru
          _
        // Predicated region
        $region49: #{tpu_custom_call.1} parent=11 // pred_check
          %p428 = pneg %p274
        $region50: #{tpu_custom_call.1} parent=11 // pred_check_branch
          %430 = sbr.rel (%p428) target = $region52
        $region51: #{tpu_custom_call.1} parent=11 // pred_region
          _
        $region52: #{tpu_custom_call.1} parent=11 // pred_fallthru
          _
        // Predicated region
        $region53: #{tpu_custom_call.1} parent=11 // pred_check
          %p431 = pneg %p295
        $region54: #{tpu_custom_call.1} parent=11 // pred_check_branch
          %433 = sbr.rel (%p431) target = $region56
        $region55: #{tpu_custom_call.1} parent=11 // pred_region
          _
        $region56: #{tpu_custom_call.1} parent=11 // pred_fallthru
          _
        // Predicated region
        $region57: #{tpu_custom_call.1} parent=11 // pred_check
          %p434 = pneg %p316
        $region58: #{tpu_custom_call.1} parent=11 // pred_check_branch
          %436 = sbr.rel (%p434) target = $region60
        $region59: #{tpu_custom_call.1} parent=11 // pred_region
          _
        $region60: #{tpu_custom_call.1} parent=11 // pred_fallthru
          _
        // Predicated region
        $region61: #{tpu_custom_call.1} parent=11 // pred_check
          %p437 = pneg %p337
        $region62: #{tpu_custom_call.1} parent=11 // pred_check_branch
          %439 = sbr.rel (%p437) target = $region64
        $region63: #{tpu_custom_call.1} parent=11 // pred_region
          _
        $region64: #{tpu_custom_call.1} parent=11 // pred_fallthru
          _
        // Predicated region
        $region65: #{tpu_custom_call.1} parent=11 // pred_check
          %p440 = pneg %p358
        $region66: #{tpu_custom_call.1} parent=11 // pred_check_branch
          %442 = sbr.rel (%p440) target = $region68
        $region67: #{tpu_custom_call.1} parent=11 // pred_region
          _
        $region68: #{tpu_custom_call.1} parent=11 // pred_fallthru
          _
      $region12: #{tpu_custom_call.1} parent=5 // pred_fallthru
        _
      %p443 = scmp.lt.s32.totalorder %s24, 2
      // Predicated region
      $region69: #{tpu_custom_call.1} parent=5 // pred_check
        %p444 = pneg %p443
      $region70: #{tpu_custom_call.1} parent=5 // pred_check_branch
        %446 = sbr.rel (%p444) target = $region72
      $region71: #{tpu_custom_call.1} parent=5 // pred_region
        // Predicated region
        $region73: #{tpu_custom_call.1} parent=71 // pred_check
          %p447 = pneg %p58
        $region74: #{tpu_custom_call.1} parent=71 // pred_check_branch
          %449 = sbr.rel (%p447) target = $region76
        $region75: #{tpu_custom_call.1} parent=71 // pred_region
          %p450 = scmp.lt.s32.totalorder %s31, 1
          %s451 = scalar_select %p450, %s31, 1
          %p452 = scmp.lt.s32.totalorder %s32, 0
          %s453 = scalar_select %p452, %s32, 0
          %s454 = smul.addr %s451, 4
          %s455 = sadd.s32 %s453, %s454
          %s456 = smul.addr %s455, 8
          %s457 = scalar_lea.vmem %s0, %s456
        $region76: #{tpu_custom_call.1} parent=71 // pred_fallthru
          _
      $region72: #{tpu_custom_call.1} parent=5 // pred_fallthru
        _
      %p458 = scmp.le.s32.totalorder 1, %s24
      %p459 = scmp.lt.s32.totalorder %s24, 3
      %p460 = pnand %p458, %p459
      %p461 = pneg %p460
      // Predicated region
      $region77: #{tpu_custom_call.1} parent=5 // pred_check
        _
      $region78: #{tpu_custom_call.1} parent=5 // pred_check_branch
        %463 = sbr.rel (%p460) target = $region80
      $region79: #{tpu_custom_call.1} parent=5 // pred_region
        %s464 = ssub.s32 %s24, 1
        %p465 = scmp.lt.s32.totalorder %s33, 1
        %s466 = scalar_select %p465, %s33, 1
        %p467 = scmp.lt.s32.totalorder %s34, 0
        %s468 = scalar_select %p467, %s34, 0
        %s469 = smul.addr %s466, 4
        %s470 = sadd.s32 %s468, %s469
        %s471 = smul.addr %s470, 8
        %s472 = scalar_lea.vmem %s0, %s471
        %p473 = pneg %p64
        %p474 = pneg %p61
        %p475 = pneg %p85
        %p476 = pneg %p82
        %p477 = pneg %p106
        %p478 = pneg %p103
        %p479 = pneg %p127
        %p480 = pneg %p124
        %p481 = pneg %p148
        %p482 = pneg %p145
        %p483 = pneg %p169
        %p484 = pneg %p166
        %p485 = pneg %p190
        %p486 = pneg %p187
        %p487 = pneg %p211
        %p488 = pneg %p208
        %p489 = pneg %p232
        %p490 = pneg %p229
        %p491 = pneg %p253
        %p492 = pneg %p250
        %p493 = pneg %p274
        %p494 = pneg %p271
        %p495 = pneg %p295
        %p496 = pneg %p292
        %p497 = pneg %p316
        %p498 = pneg %p313
        %p499 = pneg %p337
        %p500 = pneg %p334
        %p501 = pneg %p358
        %p502 = pneg %p355
        %p503 = pneg %p386
        %p504 = pneg %p383
        %s505 = sand.u32 %s373, 1
        %s506 = scalar_lea.sflag [#allocation3], %s505
        %s507 = sand.u32 %s373, 1
        %s508 = smul.addr %s507, 8
        %s509 = scalar_lea.vmem [#allocation2], %s508
        %p510 = scmp.lt.s32.totalorder %s33, 1
        %s511 = scalar_select %p510, %s33, 1
        %p512 = scmp.lt.s32.totalorder %s34, 0
        %s513 = scalar_select %p512, %s34, 0
        %s514 = smul.addr %s511, 4
        %s515 = sadd.s32 %s513, %s514
        %s516 = smul.addr %s515, 8
        %s517 = scalar_lea.vmem %s0, %s516
        %v518 = vld [vmem:[%s517] sm:$0xff]
        %v519 = vld [vmem:[%s517 + $0x8] sm:$0xff]
        %v520 = vld [vmem:[%s517 + $0x10] sm:$0xff]
        %v521 = vld [vmem:[%s517 + $0x18] sm:$0xff]
        %v522 = vld [vmem:[%s1] sm:$0xff]
        %v523 = vld [vmem:[%s1 + $0x8] sm:$0xff]
        %v524 = vld [vmem:[%s1 + $0x10] sm:$0xff]
        %v525 = vld [vmem:[%s1 + $0x18] sm:$0xff]
        %v526 = vld [vmem:[%s2] sm:$0xff]
        %v527 = vld [vmem:[%s2 + $0x8] sm:$0xff]
        %v528 = vld [vmem:[%s2 + $0x10] sm:$0xff]
        %v529 = vld [vmem:[%s2 + $0x18] sm:$0xff]
        %531 = vset.pattern.permute.xlu0 0
        %532 = vperm.xlu0 %531, %v526
        %v533 = vpop.permute.xlu0 %532
        %536 = vset.pattern.permute.xlu0 0
        %537 = vperm.xlu0 %536, %v527
        %v538 = vpop.permute.xlu0 %537
        %541 = vset.pattern.permute.xlu0 0
        %542 = vperm.xlu0 %541, %v528
        %v543 = vpop.permute.xlu0 %542
        %546 = vset.pattern.permute.xlu0 0
        %547 = vperm.xlu0 %546, %v529
        %v548 = vpop.permute.xlu0 %547
        %vm550 = vcmask 261120
        %v552 = vsel %vm550, %v522, 0
        %v555 = vsel %vm550, %v523, 0
        %v558 = vsel %vm550, %v524, 0
        %v561 = vsel %vm550, %v525, 0
        %563 = vmatprep.subr.mxu0 0.0
        %564 = vmatpush1.msra.mxu0 %v518
        %565 = vmatprep.subr.mxu0 0.0
        %566 = vmatpush1.msra.mxu0 %v519
        %567 = vmatprep.subr.mxu0 0.0
        %568 = vmatpush1.msra.mxu0 %v520
        %569 = vmatprep.subr.mxu0 0.0
        %570 = vmatpush1.msra.mxu0 %v521
        %571 = vmatprep.subr.mxu0 0.0
        %572 = vmatpush1.msra.mxu0 0.0
        %573 = vmatprep.subr.mxu0 0.0
        %574 = vmatpush1.msra.mxu0 0.0
        %575 = vmatprep.subr.mxu0 0.0
        %576 = vmatpush1.msra.mxu0 0.0
        %577 = vmatprep.subr.mxu0 0.0
        %578 = vmatpush1.msra.mxu0 0.0
        %579 = vmatprep.subr.mxu0 0.0
        %580 = vmatpush1.msra.mxu0 0.0
        %581 = vmatprep.subr.mxu0 0.0
        %582 = vmatpush1.msra.mxu0 0.0
        %583 = vmatprep.subr.mxu0 0.0
        %584 = vmatpush1.msra.mxu0 0.0
        %585 = vmatprep.subr.mxu0 0.0
        %586 = vmatpush1.msra.mxu0 0.0
        %587 = vmatprep.subr.mxu0 0.0
        %588 = vmatpush1.msra.mxu0 0.0
        %589 = vmatprep.subr.mxu0 0.0
        %590 = vmatpush1.msra.mxu0 0.0
        %591 = vmatprep.subr.mxu0 0.0
        %592 = vmatpush1.msra.mxu0 0.0
        %593 = vmatprep.subr.mxu0 0.0
        %594 = vmatpush1.msra.mxu0 0.0
        %595 = vmatprep.subr.mxu0 0.0
        %596 = vmatpush1.msra.mxu0 0.0
        %597 = vmatprep.subr.mxu0 0.0
        %598 = vmatpush1.msra.mxu0 0.0
        %599 = vmatprep.subr.mxu0 0.0
        %600 = vmatpush1.msra.mxu0 0.0
        %601 = vmatprep.subr.mxu0 0.0
        %602 = vmatpush1.msra.mxu0 0.0
        %603 = vmatprep.subr.mxu0 0.0
        %604 = vmatpush1.msra.mxu0 0.0
        %605 = vmatprep.subr.mxu0 0.0
        %606 = vmatpush1.msra.mxu0 0.0
        %607 = vmatprep.subr.mxu0 0.0
        %608 = vmatpush1.msra.mxu0 0.0
        %609 = vmatprep.subr.mxu0 0.0
        %610 = vmatpush1.msra.mxu0 0.0
        %611 = vmatprep.subr.mxu0 0.0
        %612 = vmatpush1.msra.mxu0 0.0
        %613 = vmatprep.subr.mxu0 0.0
        %614 = vmatpush1.msra.mxu0 0.0
        %615 = vmatprep.subr.mxu0 0.0
        %616 = vmatpush1.msra.mxu0 0.0
        %617 = vmatprep.subr.mxu0 0.0
        %618 = vmatpush1.msra.mxu0 0.0
        %619 = vmatprep.subr.mxu0 0.0
        %620 = vmatpush1.msra.mxu0 0.0
        %621 = vmatprep.subr.mxu0 0.0
        %622 = vmatpush1.msra.mxu0 0.0
        %623 = vmatprep.subr.mxu0 0.0
        %624 = vmatpush1.msra.mxu0 0.0
        %625 = vmatprep.subr.mxu0 0.0
        %626 = vmatpush1.msra.mxu0 0.0
        %627 = vmatprep.mubr.f32.mxu0 0.0
        %628 = vmatmul.mubr.f32.gmra.mrb[0].mxu0 %v552
        %v629 = vpop.f32.mrb[0].mxu0
        %v630 = vadd.f32 %v533, %v629
        %v631 = vpop.f32.mrb[0].mxu0
        %632 = vmatprep.mubr.f32.mxu0 0.0
        %633 = vmatmul.mubr.f32.gmra.mrb[0].mxu0 %v555
        %v634 = vpop.f32.mrb[0].mxu0
        %v635 = vadd.f32 %v538, %v634
        %v636 = vpop.f32.mrb[0].mxu0
        %637 = vmatprep.mubr.f32.mxu0 0.0
        %638 = vmatmul.mubr.f32.gmra.mrb[0].mxu0 %v558
        %v639 = vpop.f32.mrb[0].mxu0
        %v640 = vadd.f32 %v543, %v639
        %v641 = vpop.f32.mrb[0].mxu0
        %642 = vmatprep.mubr.f32.mxu0 0.0
        %643 = vmatmul.mubr.f32.gmra.mrb[0].mxu0 %v561
        %v644 = vpop.f32.mrb[0].mxu0
        %v645 = vadd.f32 %v548, %v644
        %v646 = vpop.f32.mrb[0].mxu0
        %647 = vdwg.mxu0
        %v648 = vadd.f32 %v630, %v635
        %v649 = vadd.f32 %v648, %v640
        %v650 = vadd.f32 %v649, %v645
        %v651 = vrot.slane %v650, 4
        %v652 = vadd.f32 %v650, %v651
        %v653 = vrot.slane %v652, 2
        %v654 = vadd.f32 %v652, %v653
        %v655 = vrot.slane %v654, 1
        %v656 = vadd.f32 %v654, %v655
        %v657 = vmul.f32 %v656, 0.03125
        %v658 = vsub.f32 %v630, %v657
        %v659 = vsub.f32 %v635, %v657
        %v660 = vsub.f32 %v640, %v657
        %v661 = vsub.f32 %v645, %v657
        %v662 = vmul.f32 %v658, %v658
        %v663 = vmul.f32 %v659, %v659
        %v664 = vmul.f32 %v660, %v660
        %v665 = vmul.f32 %v661, %v661
        %v666 = vadd.f32 %v662, %v663
        %v667 = vadd.f32 %v666, %v664
        %v668 = vadd.f32 %v667, %v665
        %v669 = vrot.slane %v668, 4
        %v670 = vadd.f32 %v668, %v669
        %v671 = vrot.slane %v670, 2
        %v672 = vadd.f32 %v670, %v671
        %v673 = vrot.slane %v672, 1
        %v674 = vadd.f32 %v672, %v673
        %v675 = vmul.f32 %v674, 0.03125
        %v676 = vadd.f32 %v675, 1e-05
        %v677 = vrsqrt.pop %v676
        %v678 = vmul.f32 %v658, %v677
        %v679 = vmul.f32 %v659, %v677
        %v680 = vmul.f32 %v660, %v677
        %v681 = vmul.f32 %v661, %v677
        %v682 = vld [vmem:[%s3] sm:$0xff]
        %v683 = vld [vmem:[%s3 + $0x8] sm:$0xff]
        %v684 = vld [vmem:[%s3 + $0x10] sm:$0xff]
        %v685 = vld [vmem:[%s3 + $0x18] sm:$0xff]
        %687 = vset.pattern.permute.xlu0 0
        %688 = vperm.xlu0 %687, %v682
        %v689 = vpop.permute.xlu0 %688
        %692 = vset.pattern.permute.xlu0 0
        %693 = vperm.xlu0 %692, %v683
        %v694 = vpop.permute.xlu0 %693
        %697 = vset.pattern.permute.xlu0 0
        %698 = vperm.xlu0 %697, %v684
        %v699 = vpop.permute.xlu0 %698
        %702 = vset.pattern.permute.xlu0 0
        %703 = vperm.xlu0 %702, %v685
        %v704 = vpop.permute.xlu0 %703
        %v706 = vmul.f32 %v678, %v689
        %v707 = vmul.f32 %v679, %v694
        %v708 = vmul.f32 %v680, %v699
        %v709 = vmul.f32 %v681, %v704
        %v710 = vld [vmem:[%s4] sm:$0xff]
        %v711 = vld [vmem:[%s4 + $0x8] sm:$0xff]
        %v712 = vld [vmem:[%s4 + $0x10] sm:$0xff]
        %v713 = vld [vmem:[%s4 + $0x18] sm:$0xff]
        %715 = vset.pattern.permute.xlu0 0
        %716 = vperm.xlu0 %715, %v710
        %v717 = vpop.permute.xlu0 %716
        %720 = vset.pattern.permute.xlu0 0
        %721 = vperm.xlu0 %720, %v711
        %v722 = vpop.permute.xlu0 %721
        %725 = vset.pattern.permute.xlu0 0
        %726 = vperm.xlu0 %725, %v712
        %v727 = vpop.permute.xlu0 %726
        %730 = vset.pattern.permute.xlu0 0
        %731 = vperm.xlu0 %730, %v713
        %v732 = vpop.permute.xlu0 %731
        %v734 = vadd.f32 %v706, %v717
        %v735 = vadd.f32 %v707, %v722
        %v736 = vadd.f32 %v708, %v727
        %v737 = vadd.f32 %v709, %v732
        %v738 = vmax.f32 %v734, 0.0
        %v739 = vmax.f32 %v735, 0.0
        %v740 = vmax.f32 %v736, 0.0
        %v741 = vmax.f32 %v737, 0.0
        %v742 = vld [vmem:[%s5] sm:$0xff]
        %v743 = vld [vmem:[%s5 + $0x8] sm:$0xff]
        %v744 = vld [vmem:[%s6] sm:$0xff]
        %v745 = vld [vmem:[%s6 + $0x8] sm:$0xff]
        %747 = vset.pattern.permute.xlu0 0
        %748 = vperm.xlu0 %747, %v744
        %v749 = vpop.permute.xlu0 %748
        %752 = vset.pattern.permute.xlu0 0
        %753 = vperm.xlu0 %752, %v745
        %v754 = vpop.permute.xlu0 %753
        %v757 = vsel %vm550, %v742, 0
        %v760 = vsel %vm550, %v743, 0
        %762 = vmatprep.subr.mxu0 0.0
        %763 = vmatpush1.msra.mxu0 %v738
        %764 = vmatprep.subr.mxu0 0.0
        %765 = vmatpush1.msra.mxu0 %v739
        %766 = vmatprep.subr.mxu0 0.0
        %767 = vmatpush1.msra.mxu0 %v740
        %768 = vmatprep.subr.mxu0 0.0
        %769 = vmatpush1.msra.mxu0 %v741
        %770 = vmatprep.subr.mxu0 0.0
        %771 = vmatpush1.msra.mxu0 0.0
        %772 = vmatprep.subr.mxu0 0.0
        %773 = vmatpush1.msra.mxu0 0.0
        %774 = vmatprep.subr.mxu0 0.0
        %775 = vmatpush1.msra.mxu0 0.0
        %776 = vmatprep.subr.mxu0 0.0
        %777 = vmatpush1.msra.mxu0 0.0
        %778 = vmatprep.subr.mxu0 0.0
        %779 = vmatpush1.msra.mxu0 0.0
        %780 = vmatprep.subr.mxu0 0.0
        %781 = vmatpush1.msra.mxu0 0.0
        %782 = vmatprep.subr.mxu0 0.0
        %783 = vmatpush1.msra.mxu0 0.0
        %784 = vmatprep.subr.mxu0 0.0
        %785 = vmatpush1.msra.mxu0 0.0
        %786 = vmatprep.subr.mxu0 0.0
        %787 = vmatpush1.msra.mxu0 0.0
        %788 = vmatprep.subr.mxu0 0.0
        %789 = vmatpush1.msra.mxu0 0.0
        %790 = vmatprep.subr.mxu0 0.0
        %791 = vmatpush1.msra.mxu0 0.0
        %792 = vmatprep.subr.mxu0 0.0
        %793 = vmatpush1.msra.mxu0 0.0
        %794 = vmatprep.subr.mxu0 0.0
        %795 = vmatpush1.msra.mxu0 0.0
        %796 = vmatprep.subr.mxu0 0.0
        %797 = vmatpush1.msra.mxu0 0.0
        %798 = vmatprep.subr.mxu0 0.0
        %799 = vmatpush1.msra.mxu0 0.0
        %800 = vmatprep.subr.mxu0 0.0
        %801 = vmatpush1.msra.mxu0 0.0
        %802 = vmatprep.subr.mxu0 0.0
        %803 = vmatpush1.msra.mxu0 0.0
        %804 = vmatprep.subr.mxu0 0.0
        %805 = vmatpush1.msra.mxu0 0.0
        %806 = vmatprep.subr.mxu0 0.0
        %807 = vmatpush1.msra.mxu0 0.0
        %808 = vmatprep.subr.mxu0 0.0
        %809 = vmatpush1.msra.mxu0 0.0
        %810 = vmatprep.subr.mxu0 0.0
        %811 = vmatpush1.msra.mxu0 0.0
        %812 = vmatprep.subr.mxu0 0.0
        %813 = vmatpush1.msra.mxu0 0.0
        %814 = vmatprep.subr.mxu0 0.0
        %815 = vmatpush1.msra.mxu0 0.0
        %816 = vmatprep.subr.mxu0 0.0
        %817 = vmatpush1.msra.mxu0 0.0
        %818 = vmatprep.subr.mxu0 0.0
        %819 = vmatpush1.msra.mxu0 0.0
        %820 = vmatprep.subr.mxu0 0.0
        %821 = vmatpush1.msra.mxu0 0.0
        %822 = vmatprep.subr.mxu0 0.0
        %823 = vmatpush1.msra.mxu0 0.0
        %824 = vmatprep.subr.mxu0 0.0
        %825 = vmatpush1.msra.mxu0 0.0
        %826 = vmatprep.mubr.f32.mxu0 0.0
        %827 = vmatmul.mubr.f32.gmra.mrb[0].mxu0 %v757
        %v828 = vpop.f32.mrb[0].mxu0
        %v829 = vadd.f32 %v749, %v828
        %v830 = vpop.f32.mrb[0].mxu0
        %831 = vmatprep.mubr.f32.mxu0 0.0
        %832 = vmatmul.mubr.f32.gmra.mrb[0].mxu0 %v760
        %v833 = vpop.f32.mrb[0].mxu0
        %v834 = vadd.f32 %v754, %v833
        %v835 = vpop.f32.mrb[0].mxu0
        %836 = vdwg.mxu0
        %v837 = vadd.f32 %v829, %v834
        %v838 = vrot.slane %v837, 4
        %v839 = vadd.f32 %v837, %v838
        %v840 = vrot.slane %v839, 2
        %v841 = vadd.f32 %v839, %v840
        %v842 = vrot.slane %v841, 1
        %v843 = vadd.f32 %v841, %v842
        %v844 = vmul.f32 %v843, 0.0625
        %v845 = vsub.f32 %v829, %v844
        %v846 = vsub.f32 %v834, %v844
        %v847 = vmul.f32 %v845, %v845
        %v848 = vmul.f32 %v846, %v846
        %v849 = vadd.f32 %v847, %v848
        %v850 = vrot.slane %v849, 4
        %v851 = vadd.f32 %v849, %v850
        %v852 = vrot.slane %v851, 2
        %v853 = vadd.f32 %v851, %v852
        %v854 = vrot.slane %v853, 1
        %v855 = vadd.f32 %v853, %v854
        %v856 = vmul.f32 %v855, 0.0625
        %v857 = vadd.f32 %v856, 1e-05
        %v858 = vrsqrt.pop %v857
        %v859 = vmul.f32 %v845, %v858
        %v860 = vmul.f32 %v846, %v858
        %v861 = vld [vmem:[%s7] sm:$0xff]
        %v862 = vld [vmem:[%s7 + $0x8] sm:$0xff]
        %864 = vset.pattern.permute.xlu0 0
        %865 = vperm.xlu0 %864, %v861
        %v866 = vpop.permute.xlu0 %865
        %869 = vset.pattern.permute.xlu0 0
        %870 = vperm.xlu0 %869, %v862
        %v871 = vpop.permute.xlu0 %870
        %v873 = vmul.f32 %v859, %v866
        %v874 = vmul.f32 %v860, %v871
        %v875 = vld [vmem:[%s8] sm:$0xff]
        %v876 = vld [vmem:[%s8 + $0x8] sm:$0xff]
        %878 = vset.pattern.permute.xlu0 0
        %879 = vperm.xlu0 %878, %v875
        %v880 = vpop.permute.xlu0 %879
        %883 = vset.pattern.permute.xlu0 0
        %884 = vperm.xlu0 %883, %v876
        %v885 = vpop.permute.xlu0 %884
        %v887 = vadd.f32 %v873, %v880
        %v888 = vadd.f32 %v874, %v885
        %v889 = vmax.f32 %v887, 0.0
        %v890 = vmax.f32 %v888, 0.0
        %v891 = vld [vmem:[%s9] sm:$0xff]
        %v892 = vld [vmem:[%s9 + $0x8] sm:$0xff]
        %v893 = vld [vmem:[%s10] sm:$0xff]
        %v894 = vld [vmem:[%s10 + $0x8] sm:$0xff]
        %896 = vset.pattern.permute.xlu0 0
        %897 = vperm.xlu0 %896, %v893
        %v898 = vpop.permute.xlu0 %897
        %901 = vset.pattern.permute.xlu0 0
        %902 = vperm.xlu0 %901, %v894
        %v903 = vpop.permute.xlu0 %902
        %vm905 = vcmask 130048
        %v907 = vsel %vm905, %v891, 0
        %v910 = vsel %vm905, %v892, 0
        %912 = vmatprep.subr.mxu0 0.0
        %913 = vmatpush1.msra.mxu0 %v889
        %914 = vmatprep.subr.mxu0 0.0
        %915 = vmatpush1.msra.mxu0 %v890
        %916 = vmatprep.subr.mxu0 0.0
        %917 = vmatpush1.msra.mxu0 0.0
        %918 = vmatprep.subr.mxu0 0.0
        %919 = vmatpush1.msra.mxu0 0.0
        %920 = vmatprep.subr.mxu0 0.0
        %921 = vmatpush1.msra.mxu0 0.0
        %922 = vmatprep.subr.mxu0 0.0
        %923 = vmatpush1.msra.mxu0 0.0
        %924 = vmatprep.subr.mxu0 0.0
        %925 = vmatpush1.msra.mxu0 0.0
        %926 = vmatprep.subr.mxu0 0.0
        %927 = vmatpush1.msra.mxu0 0.0
        %928 = vmatprep.subr.mxu0 0.0
        %929 = vmatpush1.msra.mxu0 0.0
        %930 = vmatprep.subr.mxu0 0.0
        %931 = vmatpush1.msra.mxu0 0.0
        %932 = vmatprep.subr.mxu0 0.0
        %933 = vmatpush1.msra.mxu0 0.0
        %934 = vmatprep.subr.mxu0 0.0
        %935 = vmatpush1.msra.mxu0 0.0
        %936 = vmatprep.subr.mxu0 0.0
        %937 = vmatpush1.msra.mxu0 0.0
        %938 = vmatprep.subr.mxu0 0.0
        %939 = vmatpush1.msra.mxu0 0.0
        %940 = vmatprep.subr.mxu0 0.0
        %941 = vmatpush1.msra.mxu0 0.0
        %942 = vmatprep.subr.mxu0 0.0
        %943 = vmatpush1.msra.mxu0 0.0
        %944 = vmatprep.subr.mxu0 0.0
        %945 = vmatpush1.msra.mxu0 0.0
        %946 = vmatprep.subr.mxu0 0.0
        %947 = vmatpush1.msra.mxu0 0.0
        %948 = vmatprep.subr.mxu0 0.0
        %949 = vmatpush1.msra.mxu0 0.0
        %950 = vmatprep.subr.mxu0 0.0
        %951 = vmatpush1.msra.mxu0 0.0
        %952 = vmatprep.subr.mxu0 0.0
        %953 = vmatpush1.msra.mxu0 0.0
        %954 = vmatprep.subr.mxu0 0.0
        %955 = vmatpush1.msra.mxu0 0.0
        %956 = vmatprep.subr.mxu0 0.0
        %957 = vmatpush1.msra.mxu0 0.0
        %958 = vmatprep.subr.mxu0 0.0
        %959 = vmatpush1.msra.mxu0 0.0
        %960 = vmatprep.subr.mxu0 0.0
        %961 = vmatpush1.msra.mxu0 0.0
        %962 = vmatprep.subr.mxu0 0.0
        %963 = vmatpush1.msra.mxu0 0.0
        %964 = vmatprep.subr.mxu0 0.0
        %965 = vmatpush1.msra.mxu0 0.0
        %966 = vmatprep.subr.mxu0 0.0
        %967 = vmatpush1.msra.mxu0 0.0
        %968 = vmatprep.subr.mxu0 0.0
        %969 = vmatpush1.msra.mxu0 0.0
        %970 = vmatprep.subr.mxu0 0.0
        %971 = vmatpush1.msra.mxu0 0.0
        %972 = vmatprep.subr.mxu0 0.0
        %973 = vmatpush1.msra.mxu0 0.0
        %974 = vmatprep.subr.mxu0 0.0
        %975 = vmatpush1.msra.mxu0 0.0
        %976 = vmatprep.mubr.f32.mxu0 0.0
        %977 = vmatmul.mubr.f32.gmra.mrb[0].mxu0 %v907
        %v978 = vpop.f32.mrb[0].mxu0
        %v979 = vadd.f32 %v898, %v978
        %v980 = vpop.f32.mrb[0].mxu0
        %981 = vmatprep.mubr.f32.mxu0 0.0
        %982 = vmatmul.mubr.f32.gmra.mrb[0].mxu0 %v910
        %v983 = vpop.f32.mrb[0].mxu0
        %v984 = vadd.f32 %v903, %v983
        %v985 = vpop.f32.mrb[0].mxu0
        %986 = vdwg.mxu0
        %v987 = vadd.f32 %v979, %v984
        %v988 = vrot.slane %v987, 4
        %v989 = vadd.f32 %v987, %v988
        %v990 = vrot.slane %v989, 2
        %v991 = vadd.f32 %v989, %v990
        %v992 = vrot.slane %v991, 1
        %v993 = vadd.f32 %v991, %v992
        %v994 = vmul.f32 %v993, 0.0625
        %v995 = vsub.f32 %v979, %v994
        %v996 = vsub.f32 %v984, %v994
        %v997 = vmul.f32 %v995, %v995
        %v998 = vmul.f32 %v996, %v996
        %v999 = vadd.f32 %v997, %v998
        %v1000 = vrot.slane %v999, 4
        %v1001 = vadd.f32 %v999, %v1000
        %v1002 = vrot.slane %v1001, 2
        %v1003 = vadd.f32 %v1001, %v1002
        %v1004 = vrot.slane %v1003, 1
        %v1005 = vadd.f32 %v1003, %v1004
        %v1006 = vmul.f32 %v1005, 0.0625
        %v1007 = vadd.f32 %v1006, 1e-05
        %v1008 = vrsqrt.pop %v1007
        %v1009 = vmul.f32 %v995, %v1008
        %v1010 = vmul.f32 %v996, %v1008
        %v1011 = vld [vmem:[%s11] sm:$0xff]
        %v1012 = vld [vmem:[%s11 + $0x8] sm:$0xff]
        %1014 = vset.pattern.permute.xlu0 0
        %1015 = vperm.xlu0 %1014, %v1011
        %v1016 = vpop.permute.xlu0 %1015
        %1019 = vset.pattern.permute.xlu0 0
        %1020 = vperm.xlu0 %1019, %v1012
        %v1021 = vpop.permute.xlu0 %1020
        %v1023 = vmul.f32 %v1009, %v1016
        %v1024 = vmul.f32 %v1010, %v1021
        %v1025 = vld [vmem:[%s12] sm:$0xff]
        %v1026 = vld [vmem:[%s12 + $0x8] sm:$0xff]
        %1028 = vset.pattern.permute.xlu0 0
        %1029 = vperm.xlu0 %1028, %v1025
        %v1030 = vpop.permute.xlu0 %1029
        %1033 = vset.pattern.permute.xlu0 0
        %1034 = vperm.xlu0 %1033, %v1026
        %v1035 = vpop.permute.xlu0 %1034
        %v1037 = vadd.f32 %v1023, %v1030
        %v1038 = vadd.f32 %v1024, %v1035
        %v1039 = vmax.f32 %v1037, 0.0
        %v1040 = vmax.f32 %v1038, 0.0
        %v1041 = vld [vmem:[%s13] sm:$0xff]
        %v1042 = vld [vmem:[%s14] sm:$0xff]
        %1044 = vset.pattern.permute.xlu0 0
        %1045 = vperm.xlu0 %1044, %v1042
        %v1046 = vpop.permute.xlu0 %1045
        %v1049 = vsel %vm905, %v1041, 0
        %1051 = vmatprep.subr.mxu0 0.0
        %1052 = vmatpush1.msra.mxu0 %v1039
        %1053 = vmatprep.subr.mxu0 0.0
        %1054 = vmatpush1.msra.mxu0 %v1040
        %1055 = vmatprep.subr.mxu0 0.0
        %1056 = vmatpush1.msra.mxu0 0.0
        %1057 = vmatprep.subr.mxu0 0.0
        %1058 = vmatpush1.msra.mxu0 0.0
        %1059 = vmatprep.subr.mxu0 0.0
        %1060 = vmatpush1.msra.mxu0 0.0
        %1061 = vmatprep.subr.mxu0 0.0
        %1062 = vmatpush1.msra.mxu0 0.0
        %1063 = vmatprep.subr.mxu0 0.0
        %1064 = vmatpush1.msra.mxu0 0.0
        %1065 = vmatprep.subr.mxu0 0.0
        %1066 = vmatpush1.msra.mxu0 0.0
        %1067 = vmatprep.subr.mxu0 0.0
        %1068 = vmatpush1.msra.mxu0 0.0
        %1069 = vmatprep.subr.mxu0 0.0
        %1070 = vmatpush1.msra.mxu0 0.0
        %1071 = vmatprep.subr.mxu0 0.0
        %1072 = vmatpush1.msra.mxu0 0.0
        %1073 = vmatprep.subr.mxu0 0.0
        %1074 = vmatpush1.msra.mxu0 0.0
        %1075 = vmatprep.subr.mxu0 0.0
        %1076 = vmatpush1.msra.mxu0 0.0
        %1077 = vmatprep.subr.mxu0 0.0
        %1078 = vmatpush1.msra.mxu0 0.0
        %1079 = vmatprep.subr.mxu0 0.0
        %1080 = vmatpush1.msra.mxu0 0.0
        %1081 = vmatprep.subr.mxu0 0.0
        %1082 = vmatpush1.msra.mxu0 0.0
        %1083 = vmatprep.subr.mxu0 0.0
        %1084 = vmatpush1.msra.mxu0 0.0
        %1085 = vmatprep.subr.mxu0 0.0
        %1086 = vmatpush1.msra.mxu0 0.0
        %1087 = vmatprep.subr.mxu0 0.0
        %1088 = vmatpush1.msra.mxu0 0.0
        %1089 = vmatprep.subr.mxu0 0.0
        %1090 = vmatpush1.msra.mxu0 0.0
        %1091 = vmatprep.subr.mxu0 0.0
        %1092 = vmatpush1.msra.mxu0 0.0
        %1093 = vmatprep.subr.mxu0 0.0
        %1094 = vmatpush1.msra.mxu0 0.0
        %1095 = vmatprep.subr.mxu0 0.0
        %1096 = vmatpush1.msra.mxu0 0.0
        %1097 = vmatprep.subr.mxu0 0.0
        %1098 = vmatpush1.msra.mxu0 0.0
        %1099 = vmatprep.subr.mxu0 0.0
        %1100 = vmatpush1.msra.mxu0 0.0
        %1101 = vmatprep.subr.mxu0 0.0
        %1102 = vmatpush1.msra.mxu0 0.0
        %1103 = vmatprep.subr.mxu0 0.0
        %1104 = vmatpush1.msra.mxu0 0.0
        %1105 = vmatprep.subr.mxu0 0.0
        %1106 = vmatpush1.msra.mxu0 0.0
        %1107 = vmatprep.subr.mxu0 0.0
        %1108 = vmatpush1.msra.mxu0 0.0
        %1109 = vmatprep.subr.mxu0 0.0
        %1110 = vmatpush1.msra.mxu0 0.0
        %1111 = vmatprep.subr.mxu0 0.0
        %1112 = vmatpush1.msra.mxu0 0.0
        %1113 = vmatprep.subr.mxu0 0.0
        %1114 = vmatpush1.msra.mxu0 0.0
        %1115 = vmatprep.mubr.f32.mxu0 0.0
        %1116 = vmatmul.mubr.f32.gmra.mrb[0].mxu0 %v1049
        %v1117 = vpop.f32.mrb[0].mxu0
        %v1118 = vadd.f32 %v1046, %v1117
        %v1119 = vpop.f32.mrb[0].mxu0
        %1120 = vdwg.mxu0
        %1121 = vst [vmem:[%s509] sm:$0xff] %v1118
        %s1122 = sand.u32 %s373, 1
        %s1123 = scalar_lea.sflag [#allocation3], %s1122
        %s1124 = sand.u32 %s373, 1
        %s1125 = smul.addr %s1124, 8
        %s1126 = scalar_lea.vmem [#allocation2], %s1125
        // Predicated region
        $region81: #{tpu_custom_call.1} parent=79 // pred_check
          %p1127 = pneg %p383
        $region82: #{tpu_custom_call.1} parent=79 // pred_check_branch
          %1129 = sbr.rel (%p1127) target = $region84
        $region83: #{tpu_custom_call.1} parent=79 // pred_region
          %s1131 = ssub.s32 128, 128
          %1132 = vsyncadd %s1123, %s1131
          %s1133 = sadd.s32 %s34, %s33
          %s1134 = smul.addr %s1133, 128
          %s1135 = scalar_lea.hbm %s15, %s1134
          %s1137 = sshll.u32 %s1126, 4
          %s1138 = int_to_ptr.vmem [resolvable:$true] %s1137
          %1140 = dma.vmem_to_hbm [thread:$0]  %s1138, 128, %s1135, %s1123
        $region84: #{tpu_custom_call.1} parent=79 // pred_fallthru
          _
      $region80: #{tpu_custom_call.1} parent=5 // pred_fallthru
        _
      %p1141 = scmp.le.s32.totalorder 2, %s24
      // Predicated region
      $region85: #{tpu_custom_call.1} parent=5 // pred_check
        %p1142 = pneg %p1141
      $region86: #{tpu_custom_call.1} parent=5 // pred_check_branch
        %1144 = sbr.rel (%p1142) target = $region88
      $region87: #{tpu_custom_call.1} parent=5 // pred_region
        %s1145 = ssub.s32 %s24, 2
        // Predicated region
        $region89: #{tpu_custom_call.1} parent=87 // pred_check
          %p1146 = pneg %p389
        $region90: #{tpu_custom_call.1} parent=87 // pred_check_branch
          %1148 = sbr.rel (%p1146) target = $region92
        $region91: #{tpu_custom_call.1} parent=87 // pred_region
          %s1149 = sand.u32 %s374, 1
          %s1150 = scalar_lea.sflag [#allocation3], %s1149
          %s1151 = sand.u32 %s374, 1
          %s1152 = smul.addr %s1151, 8
          %s1153 = scalar_lea.vmem [#allocation2], %s1152
          %1154 = dma.done %s1150, 128
        $region92: #{tpu_custom_call.1} parent=87 // pred_fallthru
          _
      $region88: #{tpu_custom_call.1} parent=5 // pred_fallthru
        _
    $region6: #{tpu_custom_call.1} parent=1 // loop_footer
      %s28 = sadd.s32 1, %s24
    $region7: #{tpu_custom_call.1} parent=1 // loop_footer_branch
      %23 = sbr.rel target = $region3
    $region8: #{tpu_custom_call.1} parent=1 // loop_exit
      _
    %1155 = vsyncpa [#allocation3], 1
    %s1156 = scalar_lea.sflag [#allocation3], 1
    %1157 = vsyncpa %s1156, 1

</llo_original>
